<compile_context>
chip_gen: v7x
topology: tpu7x:2x2x1
jax: 0.10.0
libtpu: 0.0.40
codegen_flags: <defaults>
</compile_context>

<pallas_src>
import functools

import jax
import jax.numpy as jnp
from jax.experimental import pallas as pl
from jax.experimental.pallas import tpu as pltpu

NUM_CLASSES = 59
TRAIN_MARKER = 60
SUPP_MARKER = 61
PROB_BITS = 24
PROB_SCALE = 1 << PROB_BITS          # fixed-point denominator for probabilities


def _hash_u32(x):
    """lowbias32/murmur-style avalanche hash on uint32 vectors (pure VPU int ops)."""
    x = x ^ (x >> 16)
    x = x * jnp.uint32(0x7FEB352D)
    x = x ^ (x >> 15)
    x = x * jnp.uint32(0x846CA68B)
    x = x ^ (x >> 16)
    return x


def augment_kernel(seed_ref, thr_train_ref, thr_supp_ref, y_ref, out_ref, *,
                   p_threshold):
    y = y_ref[...]                                  # (tn, L) int32
    tn, L = y.shape

    # ---- counter-based PRNG: one unique 32-bit counter per element ----------
    row = jax.lax.broadcasted_iota(jnp.int32, (tn, L), 0).astype(jnp.uint32)
    col = jax.lax.broadcasted_iota(jnp.int32, (tn, L), 1).astype(jnp.uint32)
    row0 = (pl.program_id(0) * tn).astype(jnp.uint32)          # global row base
    seed = seed_ref[0].astype(jnp.uint32)
    base = (row + row0) * jnp.uint32(L) + col + seed * jnp.uint32(0x9E3779B9)

    # categorical draw: 24-bit uniform compared against fixed-point CDF
    u_cat = (_hash_u32(base) >> 8).astype(jnp.int32)            # in [0, 2^24)

    # ---- fused train/supp inverse-CDF scan (sample in [0, 58]) --------------
    is_train = (y[:, 0:1] == TRAIN_MARKER)                      # (tn, 1) split
    samp = jnp.zeros((tn, L), jnp.int32)
    for k in range(NUM_CLASSES - 1):
        # per-row threshold select stays (tn,1); broadcasts over lanes
        t_k = jnp.where(is_train, thr_train_ref[k], thr_supp_ref[k])
        samp = samp + (u_cat >= t_k).astype(jnp.int32)

    # ---- Bernoulli(p) mask from a second, independent hash stream -----------
    u_msk = (_hash_u32(base ^ jnp.uint32(0x85EBCA6B)) >> 8).astype(jnp.int32)
    replace = (u_msk < p_threshold) & (y < NUM_CLASSES)         # keep specials
    out_ref[...] = jnp.where(replace, samp, y).astype(out_ref.dtype)


def _fixed_point_cdf(counts):
    """round(cumsum(normalized counts) * 2^24) as int32 thresholds, shape (59,)."""
    counts = jnp.asarray(counts, jnp.float32)
    cdf = jnp.cumsum(counts / counts.sum())
    return jnp.round(cdf * float(PROB_SCALE)).astype(jnp.int32)


def _pick_row_tile(n_rows, n_cols, max_block_bytes=1 << 20):
    """Largest row tile that divides N, keeps blocks ~<=1 MiB and respects the
    TPU sublane rule (multiple of 8, or the full row count)."""
    max_rows = max(1, max_block_bytes // (n_cols * 4))
    if n_rows <= max_rows:
        return n_rows
    best = None
    for d in range(8, max_rows + 1, 8):
        if n_rows % d == 0:
            best = d
    return best if best is not None else n_rows


def augment_y(y, train_counts, supp_counts, *, seed=0, p=0.3, tn=None):
    """JAX/Pallas equivalent of AugmentY.forward (noise_labels with prob p)."""
    N, L = y.shape
    if tn is None:
        tn = _pick_row_tile(N, L)
    assert N % tn == 0, "row count must be divisible by the row tile"

    thr_train = _fixed_point_cdf(train_counts)
    thr_supp = _fixed_point_cdf(supp_counts)
    seed_arr = jnp.array([seed], dtype=jnp.int32)
    p_threshold = int(round(p * PROB_SCALE))

    kernel = functools.partial(augment_kernel, p_threshold=p_threshold)

    return pl.pallas_call(
        kernel,
        out_shape=jax.ShapeDtypeStruct((N, L), y.dtype),
        grid_spec=pltpu.PrefetchScalarGridSpec(
            num_scalar_prefetch=3,                       # seed, thr_train, thr_supp
            grid=(N // tn,),
            in_specs=[pl.BlockSpec((tn, L), lambda i, *_: (i, 0))],   # y tile
            out_specs=pl.BlockSpec((tn, L), lambda i, *_: (i, 0)),
        ),
        compiler_params=pltpu.CompilerParams(
            dimension_semantics=("parallel",),           # tiles are independent
            vmem_limit_bytes=32 * 1024 * 1024,
        ),
    )(seed_arr, thr_train, thr_supp, y)


if __name__ == "__main__":
    key = jax.random.PRNGKey(0)
    N, L = 16, 128  # small shapes; L = 128 keeps the lane dim aligned

    k_marker, k_body = jax.random.split(key)
    # Labels in [0, 70): values >= 59 are "special" and must be preserved.
    y = jax.random.randint(k_body, (N, L), 0, 70, dtype=jnp.int32)
    markers = jax.random.bernoulli(k_marker, 0.5, (N,)).astype(jnp.int32) + TRAIN_MARKER
    y = y.at[:, 0].set(markers)  # column 0 holds the 60/61 split marker

    # Deterministic stand-in for the dataloader-collected histograms.
    train_counts = jnp.arange(1, NUM_CLASSES + 1, dtype=jnp.float32)
    supp_counts = jnp.arange(NUM_CLASSES, 0, -1, dtype=jnp.float32)
    # TODO(synk): the original __init__ accumulates these counts from a
    # dataloader; synthetic counts are used here instead.

    out = jax.block_until_ready(augment_y(y, train_counts, supp_counts, seed=0, p=0.3))

    # Sanity checks mirroring the PyTorch semantics.
    assert out.shape == y.shape and out.dtype == y.dtype
    keep_mask = y >= NUM_CLASSES
    assert bool(jnp.all(jnp.where(keep_mask, out == y, True))), \
        "special tokens (>= 59) must be preserved"
    changed = out != y
    assert bool(jnp.all(jnp.where(changed, (out >= 0) & (out < NUM_CLASSES), True))), \
        "noised labels must lie in [0, 59)"
    eligible = int(jnp.sum(~keep_mask))
    frac = float(jnp.sum(changed)) / float(eligible)
    assert 0.05 < frac < 0.6, f"noised fraction {frac} far from p=0.3"

    print("KERNEL_OK")
</pallas_src>

<mosaic_0001>
module attributes {stable_mosaic.version = 11 : i64} {
  func.func @augment_kernel(%arg0: i32, %arg1: memref<1xi32, #tpu.memory_space<smem>>, %arg2: memref<59xi32, #tpu.memory_space<smem>>, %arg3: memref<59xi32, #tpu.memory_space<smem>>, %arg4: memref<16x128xi32, #tpu.memory_space<vmem>>, %arg5: memref<16x128xi32, #tpu.memory_space<vmem>>) attributes {dimension_semantics = [#tpu.dimension_semantics<parallel>], iteration_bounds = array<i64: 1>, scalar_prefetch = 3 : i64, scratch_operands = 0 : i64, tpu.core_type = #tpu.core_type<tc>, window_params = [{transform_indices = @transform_0, window_bounds = array<i64: 16, 128>}, {transform_indices = @transform_1, window_bounds = array<i64: 16, 128>}]} {
    %c0 = arith.constant 0 : index
    %c0_0 = arith.constant 0 : index
    %0 = vector.load %arg4[%c0, %c0_0] : memref<16x128xi32, #tpu.memory_space<vmem>>, vector<16x128xi32>
    %1 = tpu.iota {dimensions = array<i32: 0>} : vector<16x128xi32>
    %2 = tpu.iota {dimensions = array<i32: 1>} : vector<16x128xi32>
    %c16_i32 = arith.constant 16 : i32
    %3 = arith.muli %arg0, %c16_i32 : i32
    %c0_1 = arith.constant 0 : index
    %4 = memref.load %arg1[%c0_1] : memref<1xi32, #tpu.memory_space<smem>>
    %5 = vector.broadcast %3 : i32 to vector<16x128xi32>
    %6 = arith.addi %1, %5 : vector<16x128xi32>
    %c128_i32 = arith.constant 128 : i32
    %7 = vector.broadcast %c128_i32 : i32 to vector<16x128xi32>
    %8 = arith.muli %6, %7 : vector<16x128xi32>
    %9 = arith.addi %8, %2 : vector<16x128xi32>
    %c-1640531527_i32 = arith.constant -1640531527 : i32
    %10 = arith.muli %4, %c-1640531527_i32 : i32
    %11 = vector.broadcast %10 : i32 to vector<16x128xi32>
    %12 = arith.addi %9, %11 : vector<16x128xi32>
    %c16_i32_2 = arith.constant 16 : i32
    %13 = vector.broadcast %c16_i32_2 : i32 to vector<16x128xi32>
    %14 = arith.shrui %12, %13 : vector<16x128xi32>
    %15 = arith.xori %12, %14 : vector<16x128xi32>
    %c2146121005_i32 = arith.constant 2146121005 : i32
    %16 = vector.broadcast %c2146121005_i32 : i32 to vector<16x128xi32>
    %17 = arith.muli %15, %16 : vector<16x128xi32>
    %c15_i32 = arith.constant 15 : i32
    %18 = vector.broadcast %c15_i32 : i32 to vector<16x128xi32>
    %19 = arith.shrui %17, %18 : vector<16x128xi32>
    %20 = arith.xori %17, %19 : vector<16x128xi32>
    %c-2073254261_i32 = arith.constant -2073254261 : i32
    %21 = vector.broadcast %c-2073254261_i32 : i32 to vector<16x128xi32>
    %22 = arith.muli %20, %21 : vector<16x128xi32>
    %c16_i32_3 = arith.constant 16 : i32
    %23 = vector.broadcast %c16_i32_3 : i32 to vector<16x128xi32>
    %24 = arith.shrui %22, %23 : vector<16x128xi32>
    %25 = arith.xori %22, %24 : vector<16x128xi32>
    %c8_i32 = arith.constant 8 : i32
    %26 = vector.broadcast %c8_i32 : i32 to vector<16x128xi32>
    %27 = arith.shrui %25, %26 : vector<16x128xi32>
    %28 = vector.extract_strided_slice %0 {offsets = [0, 0], sizes = [16, 1], strides = [1, 1]} : vector<16x128xi32> to vector<16x1xi32>
    %c60_i32 = arith.constant 60 : i32
    %29 = vector.broadcast %c60_i32 : i32 to vector<16x1xi32>
    %30 = arith.cmpi eq, %28, %29 : vector<16x1xi32>
    %c0_i32 = arith.constant 0 : i32
    %31 = vector.broadcast %c0_i32 : i32 to vector<16x128xi32>
    %c0_4 = arith.constant 0 : index
    %32 = memref.load %arg2[%c0_4] : memref<59xi32, #tpu.memory_space<smem>>
    %c0_5 = arith.constant 0 : index
    %33 = memref.load %arg3[%c0_5] : memref<59xi32, #tpu.memory_space<smem>>
    %34 = vector.broadcast %32 : i32 to vector<16x1xi32>
    %35 = vector.broadcast %33 : i32 to vector<16x1xi32>
    %36 = arith.select %30, %34, %35 : vector<16x1xi1>, vector<16x1xi32>
    %37 = vector.broadcast %36 : vector<16x1xi32> to vector<16x128xi32>
    %38 = arith.cmpi sge, %27, %37 : vector<16x128xi32>
    %39 = arith.extui %38 : vector<16x128xi1> to vector<16x128xi32>
    %40 = arith.addi %31, %39 : vector<16x128xi32>
    %c1 = arith.constant 1 : index
    %41 = memref.load %arg2[%c1] : memref<59xi32, #tpu.memory_space<smem>>
    %c1_6 = arith.constant 1 : index
    %42 = memref.load %arg3[%c1_6] : memref<59xi32, #tpu.memory_space<smem>>
    %43 = vector.broadcast %41 : i32 to vector<16x1xi32>
    %44 = vector.broadcast %42 : i32 to vector<16x1xi32>
    %45 = arith.select %30, %43, %44 : vector<16x1xi1>, vector<16x1xi32>
    %46 = vector.broadcast %45 : vector<16x1xi32> to vector<16x128xi32>
    %47 = arith.cmpi sge, %27, %46 : vector<16x128xi32>
    %48 = arith.extui %47 : vector<16x128xi1> to vector<16x128xi32>
    %49 = arith.addi %40, %48 : vector<16x128xi32>
    %c2 = arith.constant 2 : index
    %50 = memref.load %arg2[%c2] : memref<59xi32, #tpu.memory_space<smem>>
    %c2_7 = arith.constant 2 : index
    %51 = memref.load %arg3[%c2_7] : memref<59xi32, #tpu.memory_space<smem>>
    %52 = vector.broadcast %50 : i32 to vector<16x1xi32>
    %53 = vector.broadcast %51 : i32 to vector<16x1xi32>
    %54 = arith.select %30, %52, %53 : vector<16x1xi1>, vector<16x1xi32>
    %55 = vector.broadcast %54 : vector<16x1xi32> to vector<16x128xi32>
    %56 = arith.cmpi sge, %27, %55 : vector<16x128xi32>
    %57 = arith.extui %56 : vector<16x128xi1> to vector<16x128xi32>
    %58 = arith.addi %49, %57 : vector<16x128xi32>
    %c3 = arith.constant 3 : index
    %59 = memref.load %arg2[%c3] : memref<59xi32, #tpu.memory_space<smem>>
    %c3_8 = arith.constant 3 : index
    %60 = memref.load %arg3[%c3_8] : memref<59xi32, #tpu.memory_space<smem>>
    %61 = vector.broadcast %59 : i32 to vector<16x1xi32>
    %62 = vector.broadcast %60 : i32 to vector<16x1xi32>
    %63 = arith.select %30, %61, %62 : vector<16x1xi1>, vector<16x1xi32>
    %64 = vector.broadcast %63 : vector<16x1xi32> to vector<16x128xi32>
    %65 = arith.cmpi sge, %27, %64 : vector<16x128xi32>
    %66 = arith.extui %65 : vector<16x128xi1> to vector<16x128xi32>
    %67 = arith.addi %58, %66 : vector<16x128xi32>
    %c4 = arith.constant 4 : index
    %68 = memref.load %arg2[%c4] : memref<59xi32, #tpu.memory_space<smem>>
    %c4_9 = arith.constant 4 : index
    %69 = memref.load %arg3[%c4_9] : memref<59xi32, #tpu.memory_space<smem>>
    %70 = vector.broadcast %68 : i32 to vector<16x1xi32>
    %71 = vector.broadcast %69 : i32 to vector<16x1xi32>
    %72 = arith.select %30, %70, %71 : vector<16x1xi1>, vector<16x1xi32>
    %73 = vector.broadcast %72 : vector<16x1xi32> to vector<16x128xi32>
    %74 = arith.cmpi sge, %27, %73 : vector<16x128xi32>
    %75 = arith.extui %74 : vector<16x128xi1> to vector<16x128xi32>
    %76 = arith.addi %67, %75 : vector<16x128xi32>
    %c5 = arith.constant 5 : index
    %77 = memref.load %arg2[%c5] : memref<59xi32, #tpu.memory_space<smem>>
    %c5_10 = arith.constant 5 : index
    %78 = memref.load %arg3[%c5_10] : memref<59xi32, #tpu.memory_space<smem>>
    %79 = vector.broadcast %77 : i32 to vector<16x1xi32>
    %80 = vector.broadcast %78 : i32 to vector<16x1xi32>
    %81 = arith.select %30, %79, %80 : vector<16x1xi1>, vector<16x1xi32>
    %82 = vector.broadcast %81 : vector<16x1xi32> to vector<16x128xi32>
    %83 = arith.cmpi sge, %27, %82 : vector<16x128xi32>
    %84 = arith.extui %83 : vector<16x128xi1> to vector<16x128xi32>
    %85 = arith.addi %76, %84 : vector<16x128xi32>
    %c6 = arith.constant 6 : index
    %86 = memref.load %arg2[%c6] : memref<59xi32, #tpu.memory_space<smem>>
    %c6_11 = arith.constant 6 : index
    %87 = memref.load %arg3[%c6_11] : memref<59xi32, #tpu.memory_space<smem>>
    %88 = vector.broadcast %86 : i32 to vector<16x1xi32>
    %89 = vector.broadcast %87 : i32 to vector<16x1xi32>
    %90 = arith.select %30, %88, %89 : vector<16x1xi1>, vector<16x1xi32>
    %91 = vector.broadcast %90 : vector<16x1xi32> to vector<16x128xi32>
    %92 = arith.cmpi sge, %27, %91 : vector<16x128xi32>
    %93 = arith.extui %92 : vector<16x128xi1> to vector<16x128xi32>
    %94 = arith.addi %85, %93 : vector<16x128xi32>
    %c7 = arith.constant 7 : index
    %95 = memref.load %arg2[%c7] : memref<59xi32, #tpu.memory_space<smem>>
    %c7_12 = arith.constant 7 : index
    %96 = memref.load %arg3[%c7_12] : memref<59xi32, #tpu.memory_space<smem>>
    %97 = vector.broadcast %95 : i32 to vector<16x1xi32>
    %98 = vector.broadcast %96 : i32 to vector<16x1xi32>
    %99 = arith.select %30, %97, %98 : vector<16x1xi1>, vector<16x1xi32>
    %100 = vector.broadcast %99 : vector<16x1xi32> to vector<16x128xi32>
    %101 = arith.cmpi sge, %27, %100 : vector<16x128xi32>
    %102 = arith.extui %101 : vector<16x128xi1> to vector<16x128xi32>
    %103 = arith.addi %94, %102 : vector<16x128xi32>
    %c8 = arith.constant 8 : index
    %104 = memref.load %arg2[%c8] : memref<59xi32, #tpu.memory_space<smem>>
    %c8_13 = arith.constant 8 : index
    %105 = memref.load %arg3[%c8_13] : memref<59xi32, #tpu.memory_space<smem>>
    %106 = vector.broadcast %104 : i32 to vector<16x1xi32>
    %107 = vector.broadcast %105 : i32 to vector<16x1xi32>
    %108 = arith.select %30, %106, %107 : vector<16x1xi1>, vector<16x1xi32>
    %109 = vector.broadcast %108 : vector<16x1xi32> to vector<16x128xi32>
    %110 = arith.cmpi sge, %27, %109 : vector<16x128xi32>
    %111 = arith.extui %110 : vector<16x128xi1> to vector<16x128xi32>
    %112 = arith.addi %103, %111 : vector<16x128xi32>
    %c9 = arith.constant 9 : index
    %113 = memref.load %arg2[%c9] : memref<59xi32, #tpu.memory_space<smem>>
    %c9_14 = arith.constant 9 : index
    %114 = memref.load %arg3[%c9_14] : memref<59xi32, #tpu.memory_space<smem>>
    %115 = vector.broadcast %113 : i32 to vector<16x1xi32>
    %116 = vector.broadcast %114 : i32 to vector<16x1xi32>
    %117 = arith.select %30, %115, %116 : vector<16x1xi1>, vector<16x1xi32>
    %118 = vector.broadcast %117 : vector<16x1xi32> to vector<16x128xi32>
    %119 = arith.cmpi sge, %27, %118 : vector<16x128xi32>
    %120 = arith.extui %119 : vector<16x128xi1> to vector<16x128xi32>
    %121 = arith.addi %112, %120 : vector<16x128xi32>
    %c10 = arith.constant 10 : index
    %122 = memref.load %arg2[%c10] : memref<59xi32, #tpu.memory_space<smem>>
    %c10_15 = arith.constant 10 : index
    %123 = memref.load %arg3[%c10_15] : memref<59xi32, #tpu.memory_space<smem>>
    %124 = vector.broadcast %122 : i32 to vector<16x1xi32>
    %125 = vector.broadcast %123 : i32 to vector<16x1xi32>
    %126 = arith.select %30, %124, %125 : vector<16x1xi1>, vector<16x1xi32>
    %127 = vector.broadcast %126 : vector<16x1xi32> to vector<16x128xi32>
    %128 = arith.cmpi sge, %27, %127 : vector<16x128xi32>
    %129 = arith.extui %128 : vector<16x128xi1> to vector<16x128xi32>
    %130 = arith.addi %121, %129 : vector<16x128xi32>
    %c11 = arith.constant 11 : index
    %131 = memref.load %arg2[%c11] : memref<59xi32, #tpu.memory_space<smem>>
    %c11_16 = arith.constant 11 : index
    %132 = memref.load %arg3[%c11_16] : memref<59xi32, #tpu.memory_space<smem>>
    %133 = vector.broadcast %131 : i32 to vector<16x1xi32>
    %134 = vector.broadcast %132 : i32 to vector<16x1xi32>
    %135 = arith.select %30, %133, %134 : vector<16x1xi1>, vector<16x1xi32>
    %136 = vector.broadcast %135 : vector<16x1xi32> to vector<16x128xi32>
    %137 = arith.cmpi sge, %27, %136 : vector<16x128xi32>
    %138 = arith.extui %137 : vector<16x128xi1> to vector<16x128xi32>
    %139 = arith.addi %130, %138 : vector<16x128xi32>
    %c12 = arith.constant 12 : index
    %140 = memref.load %arg2[%c12] : memref<59xi32, #tpu.memory_space<smem>>
    %c12_17 = arith.constant 12 : index
    %141 = memref.load %arg3[%c12_17] : memref<59xi32, #tpu.memory_space<smem>>
    %142 = vector.broadcast %140 : i32 to vector<16x1xi32>
    %143 = vector.broadcast %141 : i32 to vector<16x1xi32>
    %144 = arith.select %30, %142, %143 : vector<16x1xi1>, vector<16x1xi32>
    %145 = vector.broadcast %144 : vector<16x1xi32> to vector<16x128xi32>
    %146 = arith.cmpi sge, %27, %145 : vector<16x128xi32>
    %147 = arith.extui %146 : vector<16x128xi1> to vector<16x128xi32>
    %148 = arith.addi %139, %147 : vector<16x128xi32>
    %c13 = arith.constant 13 : index
    %149 = memref.load %arg2[%c13] : memref<59xi32, #tpu.memory_space<smem>>
    %c13_18 = arith.constant 13 : index
    %150 = memref.load %arg3[%c13_18] : memref<59xi32, #tpu.memory_space<smem>>
    %151 = vector.broadcast %149 : i32 to vector<16x1xi32>
    %152 = vector.broadcast %150 : i32 to vector<16x1xi32>
    %153 = arith.select %30, %151, %152 : vector<16x1xi1>, vector<16x1xi32>
    %154 = vector.broadcast %153 : vector<16x1xi32> to vector<16x128xi32>
    %155 = arith.cmpi sge, %27, %154 : vector<16x128xi32>
    %156 = arith.extui %155 : vector<16x128xi1> to vector<16x128xi32>
    %157 = arith.addi %148, %156 : vector<16x128xi32>
    %c14 = arith.constant 14 : index
    %158 = memref.load %arg2[%c14] : memref<59xi32, #tpu.memory_space<smem>>
    %c14_19 = arith.constant 14 : index
    %159 = memref.load %arg3[%c14_19] : memref<59xi32, #tpu.memory_space<smem>>
    %160 = vector.broadcast %158 : i32 to vector<16x1xi32>
    %161 = vector.broadcast %159 : i32 to vector<16x1xi32>
    %162 = arith.select %30, %160, %161 : vector<16x1xi1>, vector<16x1xi32>
    %163 = vector.broadcast %162 : vector<16x1xi32> to vector<16x128xi32>
    %164 = arith.cmpi sge, %27, %163 : vector<16x128xi32>
    %165 = arith.extui %164 : vector<16x128xi1> to vector<16x128xi32>
    %166 = arith.addi %157, %165 : vector<16x128xi32>
    %c15 = arith.constant 15 : index
    %167 = memref.load %arg2[%c15] : memref<59xi32, #tpu.memory_space<smem>>
    %c15_20 = arith.constant 15 : index
    %168 = memref.load %arg3[%c15_20] : memref<59xi32, #tpu.memory_space<smem>>
    %169 = vector.broadcast %167 : i32 to vector<16x1xi32>
    %170 = vector.broadcast %168 : i32 to vector<16x1xi32>
    %171 = arith.select %30, %169, %170 : vector<16x1xi1>, vector<16x1xi32>
    %172 = vector.broadcast %171 : vector<16x1xi32> to vector<16x128xi32>
    %173 = arith.cmpi sge, %27, %172 : vector<16x128xi32>
    %174 = arith.extui %173 : vector<16x128xi1> to vector<16x128xi32>
    %175 = arith.addi %166, %174 : vector<16x128xi32>
    %c16 = arith.constant 16 : index
    %176 = memref.load %arg2[%c16] : memref<59xi32, #tpu.memory_space<smem>>
    %c16_21 = arith.constant 16 : index
    %177 = memref.load %arg3[%c16_21] : memref<59xi32, #tpu.memory_space<smem>>
    %178 = vector.broadcast %176 : i32 to vector<16x1xi32>
    %179 = vector.broadcast %177 : i32 to vector<16x1xi32>
    %180 = arith.select %30, %178, %179 : vector<16x1xi1>, vector<16x1xi32>
    %181 = vector.broadcast %180 : vector<16x1xi32> to vector<16x128xi32>
    %182 = arith.cmpi sge, %27, %181 : vector<16x128xi32>
    %183 = arith.extui %182 : vector<16x128xi1> to vector<16x128xi32>
    %184 = arith.addi %175, %183 : vector<16x128xi32>
    %c17 = arith.constant 17 : index
    %185 = memref.load %arg2[%c17] : memref<59xi32, #tpu.memory_space<smem>>
    %c17_22 = arith.constant 17 : index
    %186 = memref.load %arg3[%c17_22] : memref<59xi32, #tpu.memory_space<smem>>
    %187 = vector.broadcast %185 : i32 to vector<16x1xi32>
    %188 = vector.broadcast %186 : i32 to vector<16x1xi32>
    %189 = arith.select %30, %187, %188 : vector<16x1xi1>, vector<16x1xi32>
    %190 = vector.broadcast %189 : vector<16x1xi32> to vector<16x128xi32>
    %191 = arith.cmpi sge, %27, %190 : vector<16x128xi32>
    %192 = arith.extui %191 : vector<16x128xi1> to vector<16x128xi32>
    %193 = arith.addi %184, %192 : vector<16x128xi32>
    %c18 = arith.constant 18 : index
    %194 = memref.load %arg2[%c18] : memref<59xi32, #tpu.memory_space<smem>>
    %c18_23 = arith.constant 18 : index
    %195 = memref.load %arg3[%c18_23] : memref<59xi32, #tpu.memory_space<smem>>
    %196 = vector.broadcast %194 : i32 to vector<16x1xi32>
    %197 = vector.broadcast %195 : i32 to vector<16x1xi32>
    %198 = arith.select %30, %196, %197 : vector<16x1xi1>, vector<16x1xi32>
    %199 = vector.broadcast %198 : vector<16x1xi32> to vector<16x128xi32>
    %200 = arith.cmpi sge, %27, %199 : vector<16x128xi32>
    %201 = arith.extui %200 : vector<16x128xi1> to vector<16x128xi32>
    %202 = arith.addi %193, %201 : vector<16x128xi32>
    %c19 = arith.constant 19 : index
    %203 = memref.load %arg2[%c19] : memref<59xi32, #tpu.memory_space<smem>>
    %c19_24 = arith.constant 19 : index
    %204 = memref.load %arg3[%c19_24] : memref<59xi32, #tpu.memory_space<smem>>
    %205 = vector.broadcast %203 : i32 to vector<16x1xi32>
    %206 = vector.broadcast %204 : i32 to vector<16x1xi32>
    %207 = arith.select %30, %205, %206 : vector<16x1xi1>, vector<16x1xi32>
    %208 = vector.broadcast %207 : vector<16x1xi32> to vector<16x128xi32>
    %209 = arith.cmpi sge, %27, %208 : vector<16x128xi32>
    %210 = arith.extui %209 : vector<16x128xi1> to vector<16x128xi32>
    %211 = arith.addi %202, %210 : vector<16x128xi32>
    %c20 = arith.constant 20 : index
    %212 = memref.load %arg2[%c20] : memref<59xi32, #tpu.memory_space<smem>>
    %c20_25 = arith.constant 20 : index
    %213 = memref.load %arg3[%c20_25] : memref<59xi32, #tpu.memory_space<smem>>
    %214 = vector.broadcast %212 : i32 to vector<16x1xi32>
    %215 = vector.broadcast %213 : i32 to vector<16x1xi32>
    %216 = arith.select %30, %214, %215 : vector<16x1xi1>, vector<16x1xi32>
    %217 = vector.broadcast %216 : vector<16x1xi32> to vector<16x128xi32>
    %218 = arith.cmpi sge, %27, %217 : vector<16x128xi32>
    %219 = arith.extui %218 : vector<16x128xi1> to vector<16x128xi32>
    %220 = arith.addi %211, %219 : vector<16x128xi32>
    %c21 = arith.constant 21 : index
    %221 = memref.load %arg2[%c21] : memref<59xi32, #tpu.memory_space<smem>>
    %c21_26 = arith.constant 21 : index
    %222 = memref.load %arg3[%c21_26] : memref<59xi32, #tpu.memory_space<smem>>
    %223 = vector.broadcast %221 : i32 to vector<16x1xi32>
    %224 = vector.broadcast %222 : i32 to vector<16x1xi32>
    %225 = arith.select %30, %223, %224 : vector<16x1xi1>, vector<16x1xi32>
    %226 = vector.broadcast %225 : vector<16x1xi32> to vector<16x128xi32>
    %227 = arith.cmpi sge, %27, %226 : vector<16x128xi32>
    %228 = arith.extui %227 : vector<16x128xi1> to vector<16x128xi32>
    %229 = arith.addi %220, %228 : vector<16x128xi32>
    %c22 = arith.constant 22 : index
    %230 = memref.load %arg2[%c22] : memref<59xi32, #tpu.memory_space<smem>>
    %c22_27 = arith.constant 22 : index
    %231 = memref.load %arg3[%c22_27] : memref<59xi32, #tpu.memory_space<smem>>
    %232 = vector.broadcast %230 : i32 to vector<16x1xi32>
    %233 = vector.broadcast %231 : i32 to vector<16x1xi32>
    %234 = arith.select %30, %232, %233 : vector<16x1xi1>, vector<16x1xi32>
    %235 = vector.broadcast %234 : vector<16x1xi32> to vector<16x128xi32>
    %236 = arith.cmpi sge, %27, %235 : vector<16x128xi32>
    %237 = arith.extui %236 : vector<16x128xi1> to vector<16x128xi32>
    %238 = arith.addi %229, %237 : vector<16x128xi32>
    %c23 = arith.constant 23 : index
    %239 = memref.load %arg2[%c23] : memref<59xi32, #tpu.memory_space<smem>>
    %c23_28 = arith.constant 23 : index
    %240 = memref.load %arg3[%c23_28] : memref<59xi32, #tpu.memory_space<smem>>
    %241 = vector.broadcast %239 : i32 to vector<16x1xi32>
    %242 = vector.broadcast %240 : i32 to vector<16x1xi32>
    %243 = arith.select %30, %241, %242 : vector<16x1xi1>, vector<16x1xi32>
    %244 = vector.broadcast %243 : vector<16x1xi32> to vector<16x128xi32>
    %245 = arith.cmpi sge, %27, %244 : vector<16x128xi32>
    %246 = arith.extui %245 : vector<16x128xi1> to vector<16x128xi32>
    %247 = arith.addi %238, %246 : vector<16x128xi32>
    %c24 = arith.constant 24 : index
    %248 = memref.load %arg2[%c24] : memref<59xi32, #tpu.memory_space<smem>>
    %c24_29 = arith.constant 24 : index
    %249 = memref.load %arg3[%c24_29] : memref<59xi32, #tpu.memory_space<smem>>
    %250 = vector.broadcast %248 : i32 to vector<16x1xi32>
    %251 = vector.broadcast %249 : i32 to vector<16x1xi32>
    %252 = arith.select %30, %250, %251 : vector<16x1xi1>, vector<16x1xi32>
    %253 = vector.broadcast %252 : vector<16x1xi32> to vector<16x128xi32>
    %254 = arith.cmpi sge, %27, %253 : vector<16x128xi32>
    %255 = arith.extui %254 : vector<16x128xi1> to vector<16x128xi32>
    %256 = arith.addi %247, %255 : vector<16x128xi32>
    %c25 = arith.constant 25 : index
    %257 = memref.load %arg2[%c25] : memref<59xi32, #tpu.memory_space<smem>>
    %c25_30 = arith.constant 25 : index
    %258 = memref.load %arg3[%c25_30] : memref<59xi32, #tpu.memory_space<smem>>
    %259 = vector.broadcast %257 : i32 to vector<16x1xi32>
    %260 = vector.broadcast %258 : i32 to vector<16x1xi32>
    %261 = arith.select %30, %259, %260 : vector<16x1xi1>, vector<16x1xi32>
    %262 = vector.broadcast %261 : vector<16x1xi32> to vector<16x128xi32>
    %263 = arith.cmpi sge, %27, %262 : vector<16x128xi32>
    %264 = arith.extui %263 : vector<16x128xi1> to vector<16x128xi32>
    %265 = arith.addi %256, %264 : vector<16x128xi32>
    %c26 = arith.constant 26 : index
    %266 = memref.load %arg2[%c26] : memref<59xi32, #tpu.memory_space<smem>>
    %c26_31 = arith.constant 26 : index
    %267 = memref.load %arg3[%c26_31] : memref<59xi32, #tpu.memory_space<smem>>
    %268 = vector.broadcast %266 : i32 to vector<16x1xi32>
    %269 = vector.broadcast %267 : i32 to vector<16x1xi32>
    %270 = arith.select %30, %268, %269 : vector<16x1xi1>, vector<16x1xi32>
    %271 = vector.broadcast %270 : vector<16x1xi32> to vector<16x128xi32>
    %272 = arith.cmpi sge, %27, %271 : vector<16x128xi32>
    %273 = arith.extui %272 : vector<16x128xi1> to vector<16x128xi32>
    %274 = arith.addi %265, %273 : vector<16x128xi32>
    %c27 = arith.constant 27 : index
    %275 = memref.load %arg2[%c27] : memref<59xi32, #tpu.memory_space<smem>>
    %c27_32 = arith.constant 27 : index
    %276 = memref.load %arg3[%c27_32] : memref<59xi32, #tpu.memory_space<smem>>
    %277 = vector.broadcast %275 : i32 to vector<16x1xi32>
    %278 = vector.broadcast %276 : i32 to vector<16x1xi32>
    %279 = arith.select %30, %277, %278 : vector<16x1xi1>, vector<16x1xi32>
    %280 = vector.broadcast %279 : vector<16x1xi32> to vector<16x128xi32>
    %281 = arith.cmpi sge, %27, %280 : vector<16x128xi32>
    %282 = arith.extui %281 : vector<16x128xi1> to vector<16x128xi32>
    %283 = arith.addi %274, %282 : vector<16x128xi32>
    %c28 = arith.constant 28 : index
    %284 = memref.load %arg2[%c28] : memref<59xi32, #tpu.memory_space<smem>>
    %c28_33 = arith.constant 28 : index
    %285 = memref.load %arg3[%c28_33] : memref<59xi32, #tpu.memory_space<smem>>
    %286 = vector.broadcast %284 : i32 to vector<16x1xi32>
    %287 = vector.broadcast %285 : i32 to vector<16x1xi32>
    %288 = arith.select %30, %286, %287 : vector<16x1xi1>, vector<16x1xi32>
    %289 = vector.broadcast %288 : vector<16x1xi32> to vector<16x128xi32>
    %290 = arith.cmpi sge, %27, %289 : vector<16x128xi32>
    %291 = arith.extui %290 : vector<16x128xi1> to vector<16x128xi32>
    %292 = arith.addi %283, %291 : vector<16x128xi32>
    %c29 = arith.constant 29 : index
    %293 = memref.load %arg2[%c29] : memref<59xi32, #tpu.memory_space<smem>>
    %c29_34 = arith.constant 29 : index
    %294 = memref.load %arg3[%c29_34] : memref<59xi32, #tpu.memory_space<smem>>
    %295 = vector.broadcast %293 : i32 to vector<16x1xi32>
    %296 = vector.broadcast %294 : i32 to vector<16x1xi32>
    %297 = arith.select %30, %295, %296 : vector<16x1xi1>, vector<16x1xi32>
    %298 = vector.broadcast %297 : vector<16x1xi32> to vector<16x128xi32>
    %299 = arith.cmpi sge, %27, %298 : vector<16x128xi32>
    %300 = arith.extui %299 : vector<16x128xi1> to vector<16x128xi32>
    %301 = arith.addi %292, %300 : vector<16x128xi32>
    %c30 = arith.constant 30 : index
    %302 = memref.load %arg2[%c30] : memref<59xi32, #tpu.memory_space<smem>>
    %c30_35 = arith.constant 30 : index
    %303 = memref.load %arg3[%c30_35] : memref<59xi32, #tpu.memory_space<smem>>
    %304 = vector.broadcast %302 : i32 to vector<16x1xi32>
    %305 = vector.broadcast %303 : i32 to vector<16x1xi32>
    %306 = arith.select %30, %304, %305 : vector<16x1xi1>, vector<16x1xi32>
    %307 = vector.broadcast %306 : vector<16x1xi32> to vector<16x128xi32>
    %308 = arith.cmpi sge, %27, %307 : vector<16x128xi32>
    %309 = arith.extui %308 : vector<16x128xi1> to vector<16x128xi32>
    %310 = arith.addi %301, %309 : vector<16x128xi32>
    %c31 = arith.constant 31 : index
    %311 = memref.load %arg2[%c31] : memref<59xi32, #tpu.memory_space<smem>>
    %c31_36 = arith.constant 31 : index
    %312 = memref.load %arg3[%c31_36] : memref<59xi32, #tpu.memory_space<smem>>
    %313 = vector.broadcast %311 : i32 to vector<16x1xi32>
    %314 = vector.broadcast %312 : i32 to vector<16x1xi32>
    %315 = arith.select %30, %313, %314 : vector<16x1xi1>, vector<16x1xi32>
    %316 = vector.broadcast %315 : vector<16x1xi32> to vector<16x128xi32>
    %317 = arith.cmpi sge, %27, %316 : vector<16x128xi32>
    %318 = arith.extui %317 : vector<16x128xi1> to vector<16x128xi32>
    %319 = arith.addi %310, %318 : vector<16x128xi32>
    %c32 = arith.constant 32 : index
    %320 = memref.load %arg2[%c32] : memref<59xi32, #tpu.memory_space<smem>>
    %c32_37 = arith.constant 32 : index
    %321 = memref.load %arg3[%c32_37] : memref<59xi32, #tpu.memory_space<smem>>
    %322 = vector.broadcast %320 : i32 to vector<16x1xi32>
    %323 = vector.broadcast %321 : i32 to vector<16x1xi32>
    %324 = arith.select %30, %322, %323 : vector<16x1xi1>, vector<16x1xi32>
    %325 = vector.broadcast %324 : vector<16x1xi32> to vector<16x128xi32>
    %326 = arith.cmpi sge, %27, %325 : vector<16x128xi32>
    %327 = arith.extui %326 : vector<16x128xi1> to vector<16x128xi32>
    %328 = arith.addi %319, %327 : vector<16x128xi32>
    %c33 = arith.constant 33 : index
    %329 = memref.load %arg2[%c33] : memref<59xi32, #tpu.memory_space<smem>>
    %c33_38 = arith.constant 33 : index
    %330 = memref.load %arg3[%c33_38] : memref<59xi32, #tpu.memory_space<smem>>
    %331 = vector.broadcast %329 : i32 to vector<16x1xi32>
    %332 = vector.broadcast %330 : i32 to vector<16x1xi32>
    %333 = arith.select %30, %331, %332 : vector<16x1xi1>, vector<16x1xi32>
    %334 = vector.broadcast %333 : vector<16x1xi32> to vector<16x128xi32>
    %335 = arith.cmpi sge, %27, %334 : vector<16x128xi32>
    %336 = arith.extui %335 : vector<16x128xi1> to vector<16x128xi32>
    %337 = arith.addi %328, %336 : vector<16x128xi32>
    %c34 = arith.constant 34 : index
    %338 = memref.load %arg2[%c34] : memref<59xi32, #tpu.memory_space<smem>>
    %c34_39 = arith.constant 34 : index
    %339 = memref.load %arg3[%c34_39] : memref<59xi32, #tpu.memory_space<smem>>
    %340 = vector.broadcast %338 : i32 to vector<16x1xi32>
    %341 = vector.broadcast %339 : i32 to vector<16x1xi32>
    %342 = arith.select %30, %340, %341 : vector<16x1xi1>, vector<16x1xi32>
    %343 = vector.broadcast %342 : vector<16x1xi32> to vector<16x128xi32>
    %344 = arith.cmpi sge, %27, %343 : vector<16x128xi32>
    %345 = arith.extui %344 : vector<16x128xi1> to vector<16x128xi32>
    %346 = arith.addi %337, %345 : vector<16x128xi32>
    %c35 = arith.constant 35 : index
    %347 = memref.load %arg2[%c35] : memref<59xi32, #tpu.memory_space<smem>>
    %c35_40 = arith.constant 35 : index
    %348 = memref.load %arg3[%c35_40] : memref<59xi32, #tpu.memory_space<smem>>
    %349 = vector.broadcast %347 : i32 to vector<16x1xi32>
    %350 = vector.broadcast %348 : i32 to vector<16x1xi32>
    %351 = arith.select %30, %349, %350 : vector<16x1xi1>, vector<16x1xi32>
    %352 = vector.broadcast %351 : vector<16x1xi32> to vector<16x128xi32>
    %353 = arith.cmpi sge, %27, %352 : vector<16x128xi32>
    %354 = arith.extui %353 : vector<16x128xi1> to vector<16x128xi32>
    %355 = arith.addi %346, %354 : vector<16x128xi32>
    %c36 = arith.constant 36 : index
    %356 = memref.load %arg2[%c36] : memref<59xi32, #tpu.memory_space<smem>>
    %c36_41 = arith.constant 36 : index
    %357 = memref.load %arg3[%c36_41] : memref<59xi32, #tpu.memory_space<smem>>
    %358 = vector.broadcast %356 : i32 to vector<16x1xi32>
    %359 = vector.broadcast %357 : i32 to vector<16x1xi32>
    %360 = arith.select %30, %358, %359 : vector<16x1xi1>, vector<16x1xi32>
    %361 = vector.broadcast %360 : vector<16x1xi32> to vector<16x128xi32>
    %362 = arith.cmpi sge, %27, %361 : vector<16x128xi32>
    %363 = arith.extui %362 : vector<16x128xi1> to vector<16x128xi32>
    %364 = arith.addi %355, %363 : vector<16x128xi32>
    %c37 = arith.constant 37 : index
    %365 = memref.load %arg2[%c37] : memref<59xi32, #tpu.memory_space<smem>>
    %c37_42 = arith.constant 37 : index
    %366 = memref.load %arg3[%c37_42] : memref<59xi32, #tpu.memory_space<smem>>
    %367 = vector.broadcast %365 : i32 to vector<16x1xi32>
    %368 = vector.broadcast %366 : i32 to vector<16x1xi32>
    %369 = arith.select %30, %367, %368 : vector<16x1xi1>, vector<16x1xi32>
    %370 = vector.broadcast %369 : vector<16x1xi32> to vector<16x128xi32>
    %371 = arith.cmpi sge, %27, %370 : vector<16x128xi32>
    %372 = arith.extui %371 : vector<16x128xi1> to vector<16x128xi32>
    %373 = arith.addi %364, %372 : vector<16x128xi32>
    %c38 = arith.constant 38 : index
    %374 = memref.load %arg2[%c38] : memref<59xi32, #tpu.memory_space<smem>>
    %c38_43 = arith.constant 38 : index
    %375 = memref.load %arg3[%c38_43] : memref<59xi32, #tpu.memory_space<smem>>
    %376 = vector.broadcast %374 : i32 to vector<16x1xi32>
    %377 = vector.broadcast %375 : i32 to vector<16x1xi32>
    %378 = arith.select %30, %376, %377 : vector<16x1xi1>, vector<16x1xi32>
    %379 = vector.broadcast %378 : vector<16x1xi32> to vector<16x128xi32>
    %380 = arith.cmpi sge, %27, %379 : vector<16x128xi32>
    %381 = arith.extui %380 : vector<16x128xi1> to vector<16x128xi32>
    %382 = arith.addi %373, %381 : vector<16x128xi32>
    %c39 = arith.constant 39 : index
    %383 = memref.load %arg2[%c39] : memref<59xi32, #tpu.memory_space<smem>>
    %c39_44 = arith.constant 39 : index
    %384 = memref.load %arg3[%c39_44] : memref<59xi32, #tpu.memory_space<smem>>
    %385 = vector.broadcast %383 : i32 to vector<16x1xi32>
    %386 = vector.broadcast %384 : i32 to vector<16x1xi32>
    %387 = arith.select %30, %385, %386 : vector<16x1xi1>, vector<16x1xi32>
    %388 = vector.broadcast %387 : vector<16x1xi32> to vector<16x128xi32>
    %389 = arith.cmpi sge, %27, %388 : vector<16x128xi32>
    %390 = arith.extui %389 : vector<16x128xi1> to vector<16x128xi32>
    %391 = arith.addi %382, %390 : vector<16x128xi32>
    %c40 = arith.constant 40 : index
    %392 = memref.load %arg2[%c40] : memref<59xi32, #tpu.memory_space<smem>>
    %c40_45 = arith.constant 40 : index
    %393 = memref.load %arg3[%c40_45] : memref<59xi32, #tpu.memory_space<smem>>
    %394 = vector.broadcast %392 : i32 to vector<16x1xi32>
    %395 = vector.broadcast %393 : i32 to vector<16x1xi32>
    %396 = arith.select %30, %394, %395 : vector<16x1xi1>, vector<16x1xi32>
    %397 = vector.broadcast %396 : vector<16x1xi32> to vector<16x128xi32>
    %398 = arith.cmpi sge, %27, %397 : vector<16x128xi32>
    %399 = arith.extui %398 : vector<16x128xi1> to vector<16x128xi32>
    %400 = arith.addi %391, %399 : vector<16x128xi32>
    %c41 = arith.constant 41 : index
    %401 = memref.load %arg2[%c41] : memref<59xi32, #tpu.memory_space<smem>>
    %c41_46 = arith.constant 41 : index
    %402 = memref.load %arg3[%c41_46] : memref<59xi32, #tpu.memory_space<smem>>
    %403 = vector.broadcast %401 : i32 to vector<16x1xi32>
    %404 = vector.broadcast %402 : i32 to vector<16x1xi32>
    %405 = arith.select %30, %403, %404 : vector<16x1xi1>, vector<16x1xi32>
    %406 = vector.broadcast %405 : vector<16x1xi32> to vector<16x128xi32>
    %407 = arith.cmpi sge, %27, %406 : vector<16x128xi32>
    %408 = arith.extui %407 : vector<16x128xi1> to vector<16x128xi32>
    %409 = arith.addi %400, %408 : vector<16x128xi32>
    %c42 = arith.constant 42 : index
    %410 = memref.load %arg2[%c42] : memref<59xi32, #tpu.memory_space<smem>>
    %c42_47 = arith.constant 42 : index
    %411 = memref.load %arg3[%c42_47] : memref<59xi32, #tpu.memory_space<smem>>
    %412 = vector.broadcast %410 : i32 to vector<16x1xi32>
    %413 = vector.broadcast %411 : i32 to vector<16x1xi32>
    %414 = arith.select %30, %412, %413 : vector<16x1xi1>, vector<16x1xi32>
    %415 = vector.broadcast %414 : vector<16x1xi32> to vector<16x128xi32>
    %416 = arith.cmpi sge, %27, %415 : vector<16x128xi32>
    %417 = arith.extui %416 : vector<16x128xi1> to vector<16x128xi32>
    %418 = arith.addi %409, %417 : vector<16x128xi32>
    %c43 = arith.constant 43 : index
    %419 = memref.load %arg2[%c43] : memref<59xi32, #tpu.memory_space<smem>>
    %c43_48 = arith.constant 43 : index
    %420 = memref.load %arg3[%c43_48] : memref<59xi32, #tpu.memory_space<smem>>
    %421 = vector.broadcast %419 : i32 to vector<16x1xi32>
    %422 = vector.broadcast %420 : i32 to vector<16x1xi32>
    %423 = arith.select %30, %421, %422 : vector<16x1xi1>, vector<16x1xi32>
    %424 = vector.broadcast %423 : vector<16x1xi32> to vector<16x128xi32>
    %425 = arith.cmpi sge, %27, %424 : vector<16x128xi32>
    %426 = arith.extui %425 : vector<16x128xi1> to vector<16x128xi32>
    %427 = arith.addi %418, %426 : vector<16x128xi32>
    %c44 = arith.constant 44 : index
    %428 = memref.load %arg2[%c44] : memref<59xi32, #tpu.memory_space<smem>>
    %c44_49 = arith.constant 44 : index
    %429 = memref.load %arg3[%c44_49] : memref<59xi32, #tpu.memory_space<smem>>
    %430 = vector.broadcast %428 : i32 to vector<16x1xi32>
    %431 = vector.broadcast %429 : i32 to vector<16x1xi32>
    %432 = arith.select %30, %430, %431 : vector<16x1xi1>, vector<16x1xi32>
    %433 = vector.broadcast %432 : vector<16x1xi32> to vector<16x128xi32>
    %434 = arith.cmpi sge, %27, %433 : vector<16x128xi32>
    %435 = arith.extui %434 : vector<16x128xi1> to vector<16x128xi32>
    %436 = arith.addi %427, %435 : vector<16x128xi32>
    %c45 = arith.constant 45 : index
    %437 = memref.load %arg2[%c45] : memref<59xi32, #tpu.memory_space<smem>>
    %c45_50 = arith.constant 45 : index
    %438 = memref.load %arg3[%c45_50] : memref<59xi32, #tpu.memory_space<smem>>
    %439 = vector.broadcast %437 : i32 to vector<16x1xi32>
    %440 = vector.broadcast %438 : i32 to vector<16x1xi32>
    %441 = arith.select %30, %439, %440 : vector<16x1xi1>, vector<16x1xi32>
    %442 = vector.broadcast %441 : vector<16x1xi32> to vector<16x128xi32>
    %443 = arith.cmpi sge, %27, %442 : vector<16x128xi32>
    %444 = arith.extui %443 : vector<16x128xi1> to vector<16x128xi32>
    %445 = arith.addi %436, %444 : vector<16x128xi32>
    %c46 = arith.constant 46 : index
    %446 = memref.load %arg2[%c46] : memref<59xi32, #tpu.memory_space<smem>>
    %c46_51 = arith.constant 46 : index
    %447 = memref.load %arg3[%c46_51] : memref<59xi32, #tpu.memory_space<smem>>
    %448 = vector.broadcast %446 : i32 to vector<16x1xi32>
    %449 = vector.broadcast %447 : i32 to vector<16x1xi32>
    %450 = arith.select %30, %448, %449 : vector<16x1xi1>, vector<16x1xi32>
    %451 = vector.broadcast %450 : vector<16x1xi32> to vector<16x128xi32>
    %452 = arith.cmpi sge, %27, %451 : vector<16x128xi32>
    %453 = arith.extui %452 : vector<16x128xi1> to vector<16x128xi32>
    %454 = arith.addi %445, %453 : vector<16x128xi32>
    %c47 = arith.constant 47 : index
    %455 = memref.load %arg2[%c47] : memref<59xi32, #tpu.memory_space<smem>>
    %c47_52 = arith.constant 47 : index
    %456 = memref.load %arg3[%c47_52] : memref<59xi32, #tpu.memory_space<smem>>
    %457 = vector.broadcast %455 : i32 to vector<16x1xi32>
    %458 = vector.broadcast %456 : i32 to vector<16x1xi32>
    %459 = arith.select %30, %457, %458 : vector<16x1xi1>, vector<16x1xi32>
    %460 = vector.broadcast %459 : vector<16x1xi32> to vector<16x128xi32>
    %461 = arith.cmpi sge, %27, %460 : vector<16x128xi32>
    %462 = arith.extui %461 : vector<16x128xi1> to vector<16x128xi32>
    %463 = arith.addi %454, %462 : vector<16x128xi32>
    %c48 = arith.constant 48 : index
    %464 = memref.load %arg2[%c48] : memref<59xi32, #tpu.memory_space<smem>>
    %c48_53 = arith.constant 48 : index
    %465 = memref.load %arg3[%c48_53] : memref<59xi32, #tpu.memory_space<smem>>
    %466 = vector.broadcast %464 : i32 to vector<16x1xi32>
    %467 = vector.broadcast %465 : i32 to vector<16x1xi32>
    %468 = arith.select %30, %466, %467 : vector<16x1xi1>, vector<16x1xi32>
    %469 = vector.broadcast %468 : vector<16x1xi32> to vector<16x128xi32>
    %470 = arith.cmpi sge, %27, %469 : vector<16x128xi32>
    %471 = arith.extui %470 : vector<16x128xi1> to vector<16x128xi32>
    %472 = arith.addi %463, %471 : vector<16x128xi32>
    %c49 = arith.constant 49 : index
    %473 = memref.load %arg2[%c49] : memref<59xi32, #tpu.memory_space<smem>>
    %c49_54 = arith.constant 49 : index
    %474 = memref.load %arg3[%c49_54] : memref<59xi32, #tpu.memory_space<smem>>
    %475 = vector.broadcast %473 : i32 to vector<16x1xi32>
    %476 = vector.broadcast %474 : i32 to vector<16x1xi32>
    %477 = arith.select %30, %475, %476 : vector<16x1xi1>, vector<16x1xi32>
    %478 = vector.broadcast %477 : vector<16x1xi32> to vector<16x128xi32>
    %479 = arith.cmpi sge, %27, %478 : vector<16x128xi32>
    %480 = arith.extui %479 : vector<16x128xi1> to vector<16x128xi32>
    %481 = arith.addi %472, %480 : vector<16x128xi32>
    %c50 = arith.constant 50 : index
    %482 = memref.load %arg2[%c50] : memref<59xi32, #tpu.memory_space<smem>>
    %c50_55 = arith.constant 50 : index
    %483 = memref.load %arg3[%c50_55] : memref<59xi32, #tpu.memory_space<smem>>
    %484 = vector.broadcast %482 : i32 to vector<16x1xi32>
    %485 = vector.broadcast %483 : i32 to vector<16x1xi32>
    %486 = arith.select %30, %484, %485 : vector<16x1xi1>, vector<16x1xi32>
    %487 = vector.broadcast %486 : vector<16x1xi32> to vector<16x128xi32>
    %488 = arith.cmpi sge, %27, %487 : vector<16x128xi32>
    %489 = arith.extui %488 : vector<16x128xi1> to vector<16x128xi32>
    %490 = arith.addi %481, %489 : vector<16x128xi32>
    %c51 = arith.constant 51 : index
    %491 = memref.load %arg2[%c51] : memref<59xi32, #tpu.memory_space<smem>>
    %c51_56 = arith.constant 51 : index
    %492 = memref.load %arg3[%c51_56] : memref<59xi32, #tpu.memory_space<smem>>
    %493 = vector.broadcast %491 : i32 to vector<16x1xi32>
    %494 = vector.broadcast %492 : i32 to vector<16x1xi32>
    %495 = arith.select %30, %493, %494 : vector<16x1xi1>, vector<16x1xi32>
    %496 = vector.broadcast %495 : vector<16x1xi32> to vector<16x128xi32>
    %497 = arith.cmpi sge, %27, %496 : vector<16x128xi32>
    %498 = arith.extui %497 : vector<16x128xi1> to vector<16x128xi32>
    %499 = arith.addi %490, %498 : vector<16x128xi32>
    %c52 = arith.constant 52 : index
    %500 = memref.load %arg2[%c52] : memref<59xi32, #tpu.memory_space<smem>>
    %c52_57 = arith.constant 52 : index
    %501 = memref.load %arg3[%c52_57] : memref<59xi32, #tpu.memory_space<smem>>
    %502 = vector.broadcast %500 : i32 to vector<16x1xi32>
    %503 = vector.broadcast %501 : i32 to vector<16x1xi32>
    %504 = arith.select %30, %502, %503 : vector<16x1xi1>, vector<16x1xi32>
    %505 = vector.broadcast %504 : vector<16x1xi32> to vector<16x128xi32>
    %506 = arith.cmpi sge, %27, %505 : vector<16x128xi32>
    %507 = arith.extui %506 : vector<16x128xi1> to vector<16x128xi32>
    %508 = arith.addi %499, %507 : vector<16x128xi32>
    %c53 = arith.constant 53 : index
    %509 = memref.load %arg2[%c53] : memref<59xi32, #tpu.memory_space<smem>>
    %c53_58 = arith.constant 53 : index
    %510 = memref.load %arg3[%c53_58] : memref<59xi32, #tpu.memory_space<smem>>
    %511 = vector.broadcast %509 : i32 to vector<16x1xi32>
    %512 = vector.broadcast %510 : i32 to vector<16x1xi32>
    %513 = arith.select %30, %511, %512 : vector<16x1xi1>, vector<16x1xi32>
    %514 = vector.broadcast %513 : vector<16x1xi32> to vector<16x128xi32>
    %515 = arith.cmpi sge, %27, %514 : vector<16x128xi32>
    %516 = arith.extui %515 : vector<16x128xi1> to vector<16x128xi32>
    %517 = arith.addi %508, %516 : vector<16x128xi32>
    %c54 = arith.constant 54 : index
    %518 = memref.load %arg2[%c54] : memref<59xi32, #tpu.memory_space<smem>>
    %c54_59 = arith.constant 54 : index
    %519 = memref.load %arg3[%c54_59] : memref<59xi32, #tpu.memory_space<smem>>
    %520 = vector.broadcast %518 : i32 to vector<16x1xi32>
    %521 = vector.broadcast %519 : i32 to vector<16x1xi32>
    %522 = arith.select %30, %520, %521 : vector<16x1xi1>, vector<16x1xi32>
    %523 = vector.broadcast %522 : vector<16x1xi32> to vector<16x128xi32>
    %524 = arith.cmpi sge, %27, %523 : vector<16x128xi32>
    %525 = arith.extui %524 : vector<16x128xi1> to vector<16x128xi32>
    %526 = arith.addi %517, %525 : vector<16x128xi32>
    %c55 = arith.constant 55 : index
    %527 = memref.load %arg2[%c55] : memref<59xi32, #tpu.memory_space<smem>>
    %c55_60 = arith.constant 55 : index
    %528 = memref.load %arg3[%c55_60] : memref<59xi32, #tpu.memory_space<smem>>
    %529 = vector.broadcast %527 : i32 to vector<16x1xi32>
    %530 = vector.broadcast %528 : i32 to vector<16x1xi32>
    %531 = arith.select %30, %529, %530 : vector<16x1xi1>, vector<16x1xi32>
    %532 = vector.broadcast %531 : vector<16x1xi32> to vector<16x128xi32>
    %533 = arith.cmpi sge, %27, %532 : vector<16x128xi32>
    %534 = arith.extui %533 : vector<16x128xi1> to vector<16x128xi32>
    %535 = arith.addi %526, %534 : vector<16x128xi32>
    %c56 = arith.constant 56 : index
    %536 = memref.load %arg2[%c56] : memref<59xi32, #tpu.memory_space<smem>>
    %c56_61 = arith.constant 56 : index
    %537 = memref.load %arg3[%c56_61] : memref<59xi32, #tpu.memory_space<smem>>
    %538 = vector.broadcast %536 : i32 to vector<16x1xi32>
    %539 = vector.broadcast %537 : i32 to vector<16x1xi32>
    %540 = arith.select %30, %538, %539 : vector<16x1xi1>, vector<16x1xi32>
    %541 = vector.broadcast %540 : vector<16x1xi32> to vector<16x128xi32>
    %542 = arith.cmpi sge, %27, %541 : vector<16x128xi32>
    %543 = arith.extui %542 : vector<16x128xi1> to vector<16x128xi32>
    %544 = arith.addi %535, %543 : vector<16x128xi32>
    %c57 = arith.constant 57 : index
    %545 = memref.load %arg2[%c57] : memref<59xi32, #tpu.memory_space<smem>>
    %c57_62 = arith.constant 57 : index
    %546 = memref.load %arg3[%c57_62] : memref<59xi32, #tpu.memory_space<smem>>
    %547 = vector.broadcast %545 : i32 to vector<16x1xi32>
    %548 = vector.broadcast %546 : i32 to vector<16x1xi32>
    %549 = arith.select %30, %547, %548 : vector<16x1xi1>, vector<16x1xi32>
    %550 = vector.broadcast %549 : vector<16x1xi32> to vector<16x128xi32>
    %551 = arith.cmpi sge, %27, %550 : vector<16x128xi32>
    %552 = arith.extui %551 : vector<16x128xi1> to vector<16x128xi32>
    %553 = arith.addi %544, %552 : vector<16x128xi32>
    %c-2048144789_i32 = arith.constant -2048144789 : i32
    %554 = vector.broadcast %c-2048144789_i32 : i32 to vector<16x128xi32>
    %555 = arith.xori %12, %554 : vector<16x128xi32>
    %c16_i32_63 = arith.constant 16 : i32
    %556 = vector.broadcast %c16_i32_63 : i32 to vector<16x128xi32>
    %557 = arith.shrui %555, %556 : vector<16x128xi32>
    %558 = arith.xori %555, %557 : vector<16x128xi32>
    %c2146121005_i32_64 = arith.constant 2146121005 : i32
    %559 = vector.broadcast %c2146121005_i32_64 : i32 to vector<16x128xi32>
    %560 = arith.muli %558, %559 : vector<16x128xi32>
    %c15_i32_65 = arith.constant 15 : i32
    %561 = vector.broadcast %c15_i32_65 : i32 to vector<16x128xi32>
    %562 = arith.shrui %560, %561 : vector<16x128xi32>
    %563 = arith.xori %560, %562 : vector<16x128xi32>
    %c-2073254261_i32_66 = arith.constant -2073254261 : i32
    %564 = vector.broadcast %c-2073254261_i32_66 : i32 to vector<16x128xi32>
    %565 = arith.muli %563, %564 : vector<16x128xi32>
    %c16_i32_67 = arith.constant 16 : i32
    %566 = vector.broadcast %c16_i32_67 : i32 to vector<16x128xi32>
    %567 = arith.shrui %565, %566 : vector<16x128xi32>
    %568 = arith.xori %565, %567 : vector<16x128xi32>
    %c8_i32_68 = arith.constant 8 : i32
    %569 = vector.broadcast %c8_i32_68 : i32 to vector<16x128xi32>
    %570 = arith.shrui %568, %569 : vector<16x128xi32>
    %c5033165_i32 = arith.constant 5033165 : i32
    %571 = vector.broadcast %c5033165_i32 : i32 to vector<16x128xi32>
    %572 = arith.cmpi slt, %570, %571 : vector<16x128xi32>
    %c59_i32 = arith.constant 59 : i32
    %573 = vector.broadcast %c59_i32 : i32 to vector<16x128xi32>
    %574 = arith.cmpi slt, %0, %573 : vector<16x128xi32>
    %575 = arith.andi %572, %574 : vector<16x128xi1>
    %576 = arith.select %575, %553, %0 : vector<16x128xi1>, vector<16x128xi32>
    %c0_69 = arith.constant 0 : index
    %c0_70 = arith.constant 0 : index
    %577 = vector.load %arg5[%c0_69, %c0_70] : memref<16x128xi32, #tpu.memory_space<vmem>>, vector<16x128xi32>
    tpu.vector_store %arg5[%c0_69, %c0_70], %576 {strides = array<i32>} : memref<16x128xi32, #tpu.memory_space<vmem>>, vector<16x128xi32>,
    return
  }
  func.func @transform_0(%arg0: i32, %arg1: memref<1xi32, #tpu.memory_space<smem>>, %arg2: memref<59xi32, #tpu.memory_space<smem>>, %arg3: memref<59xi32, #tpu.memory_space<smem>>) -> (i32, i32) {
    %c0_i32 = arith.constant 0 : i32
    %c0_i32_0 = arith.constant 0 : i32
    return %arg0, %c0_i32 : i32, i32
  }
  func.func @transform_1(%arg0: i32, %arg1: memref<1xi32, #tpu.memory_space<smem>>, %arg2: memref<59xi32, #tpu.memory_space<smem>>, %arg3: memref<59xi32, #tpu.memory_space<smem>>) -> (i32, i32) {
    %c0_i32 = arith.constant 0 : i32
    %c0_i32_0 = arith.constant 0 : i32
    return %arg0, %c0_i32 : i32, i32
  }
}

</mosaic_0001>

<llo_original>
// kernel: tpu_custom_call.1
$region0: #{tpu_custom_call.1}
  #allocation0 [shape = 'u32[]', space=smem, size = 0x4, offset = 0x4, fixed_abs, tag = 'smem constant byte address 0x4 - core index']
  #allocation1 [shape = 'u32[144,128]{1,0:T(1,128)}', space=vmem, size = 0x12000, scoped, tag = 'internal scratch']
  #allocation2 [shape = 's32[1]{0}', space=sflag, size = 0x4, scoped, tag = 'scoped memory for tpu_custom_call.1']
  #allocation3 [shape = 's32[1]{0:T(128)S(6)}', space=smem, size = 0x200, scoped, tag = 'prefetched SMEM operand 0']
  #allocation4 [shape = 'u8[512]{0}', space=smem, size = 0x200, scoped, tag = 'prefetched SMEM operand 1']
  #allocation5 [shape = 'u8[512]{0}', space=smem, size = 0x200, scoped, tag = 'prefetched SMEM operand 2']
  %s0 = inlined_call_operand.<no memory space> [shape: s32[1], index: 0, kind: input, shape index: {}]
  %s1 = inlined_call_operand.vmem [shape: s32[59], index: 1, kind: input, shape index: {}]
  %s2 = inlined_call_operand.vmem [shape: s32[59], index: 2, kind: input, shape index: {}]
  %s3 = inlined_call_operand.hbm [shape: s32[16,128], index: 3, kind: input, shape index: {}]
  %s4 = inlined_call_operand.hbm [shape: s32[16,128], index: 4, kind: output, shape index: {}]
  %s5 = sld [smem:[#allocation0]]
  $region18: #{tpu_custom_call.1} parent=0
    _
  %s7 = ssub.s32 1, %s5
  %s8 = scalar_select 0, %s7, %s5
  %9 = sst [smem:[#allocation3]] %s0
  %s10 = sshll.u32 %s1, 4
  %s11 = int_to_ptr.vmem [resolvable:$true] %s10
  %13 = dma.vmem_to_smem %s11, 16, [#allocation4], [#allocation2]
  %s14 = sshll.u32 %s2, 4
  %s15 = int_to_ptr.vmem [resolvable:$true] %s14
  %17 = dma.vmem_to_smem %s15, 16, [#allocation5], [#allocation2]
  %18 = dma.done [#allocation2], 32
  %19 = sfence
  $region1: #{tpu_custom_call.1} parent=0
    #allocation6 [shape = 'u8[8192]{0}', space=vmem, size = 0x2000, scoped, tag = 'input window, operand 3, single buffered']
    #allocation7 [shape = 's32[1]{0}', space=sflag, size = 0x4, scoped, tag = 'scoped memory for tpu_custom_call.1']
    #allocation8 [shape = 's32[1]{0}', space=sflag, size = 0x4, scoped, tag = 'scoped memory for tpu_custom_call.1']
    #allocation9 [shape = 'u8[8192]{0}', space=vmem, size = 0x2000, scoped, tag = 'output window, operand 0, single buffered']
    %20 = vsyncpa [#allocation7], 0
    %21 = vsyncpa [#allocation8], 0
    // Predicated region
    $region2: #{tpu_custom_call.1} parent=1 // pred_check
      _
    $region3: #{tpu_custom_call.1} parent=1 // pred_check_branch
      %23 = sbr.rel (0) target = $region5
    $region4: #{tpu_custom_call.1} parent=1 // pred_region
      %s25 = ssub.s32 256, 256
      %26 = vsyncadd [#allocation7], %s25
      %s27 = sshll.u32 [#allocation6], 4
      %s28 = int_to_ptr.vmem [resolvable:$true] %s27
      %33 = dma.hbm_to_vmem [thread:$0]  %s3, 256, %s28, [#allocation7], 128, 128, 8
    $region5: #{tpu_custom_call.1} parent=1 // pred_fallthru
      _
    // Predicated region
    $region6: #{tpu_custom_call.1} parent=1 // pred_check
      _
    $region7: #{tpu_custom_call.1} parent=1 // pred_check_branch
      %35 = sbr.rel (0) target = $region9
    $region8: #{tpu_custom_call.1} parent=1 // pred_region
      %36 = dma.done [#allocation7], 256
    $region9: #{tpu_custom_call.1} parent=1 // pred_fallthru
      _
    %v37 = vld [vmem:[#allocation6] sm:$0xff]
    %v38 = vld [vmem:[#allocation6 + $0x8] sm:$0xff]
    %v39 = vlaneseq
    %v40 = vshrl.u32 %v39, 7
    %v41 = vadd.s32 %v40, 8
    %v42 = vlaneseq
    %v43 = vand.u32 %v42, 127
    %s44 = smul.u32 0, 16
    %s45 = sld [smem:[#allocation3]]
    %v46 = vstv %s44
    %v47 = vadd.s32 %v40, %v46
    %v48 = vadd.s32 %v41, %v46
    %v49 = vmul.u32 %v47, 128
    %v50 = vmul.u32 %v48, 128
    %v51 = vadd.s32 %v49, %v43
    %v52 = vadd.s32 %v50, %v43
    %s53 = smul.u32 %s45, 2654435769
    %v54 = vstv %s53
    %v55 = vadd.s32 %v51, %v54
    %v56 = vadd.s32 %v52, %v54
    %v57 = vshrl.u32 %v55, 16
    %v58 = vshrl.u32 %v56, 16
    %v59 = vxor.u32 %v55, %v57
    %v60 = vxor.u32 %v56, %v58
    %v61 = vmul.u32 %v59, 2146121005
    %v62 = vmul.u32 %v60, 2146121005
    %v63 = vshrl.u32 %v61, 15
    %v64 = vshrl.u32 %v62, 15
    %v65 = vxor.u32 %v61, %v63
    %v66 = vxor.u32 %v62, %v64
    %v67 = vmul.u32 %v65, 2221713035
    %v68 = vmul.u32 %v66, 2221713035
    %v69 = vshrl.u32 %v67, 16
    %v70 = vshrl.u32 %v68, 16
    %v71 = vxor.u32 %v67, %v69
    %v72 = vxor.u32 %v68, %v70
    %v73 = vshrl.u32 %v71, 8
    %v74 = vshrl.u32 %v72, 8
    %vm75 = vcmp.eq.s32.totalorder %v37, 60
    %vm76 = vcmp.eq.s32.totalorder %v38, 60
    %s77 = sld [smem:[#allocation4]]
    %s78 = sld [smem:[#allocation5]]
    %v79 = vstv %s77
    %v80 = vstv %s78
    %v81 = vsel %vm75, %v79, %v80
    %v82 = vsel %vm76, %v79, %v80
    %83 = vset.pattern.permute.xlu0 0
    %84 = vperm.xlu0 %83, %v81
    %v85 = vpop.permute.xlu0 %84
    %86 = vset.pattern.permute.xlu0 0
    %87 = vperm.xlu0 %86, %v82
    %v88 = vpop.permute.xlu0 %87
    %vm89 = vcmp.ge.s32.totalorder %v73, %v85
    %vm90 = vcmp.ge.s32.totalorder %v74, %v88
    %v91 = vsel %vm89, 1, 0
    %v92 = vsel %vm90, 1, 0
    %s93 = sld [smem:[#allocation4 + $0x1]]
    %s94 = sld [smem:[#allocation5 + $0x1]]
    %v95 = vstv %s93
    %v96 = vstv %s94
    %v97 = vsel %vm75, %v95, %v96
    %v98 = vsel %vm76, %v95, %v96
    %99 = vset.pattern.permute.xlu0 0
    %100 = vperm.xlu0 %99, %v97
    %v101 = vpop.permute.xlu0 %100
    %102 = vset.pattern.permute.xlu0 0
    %103 = vperm.xlu0 %102, %v98
    %v104 = vpop.permute.xlu0 %103
    %vm105 = vcmp.ge.s32.totalorder %v73, %v101
    %vm106 = vcmp.ge.s32.totalorder %v74, %v104
    %v107 = vsel %vm105, 1, 0
    %v108 = vsel %vm106, 1, 0
    %v109 = vadd.s32 %v91, %v107
    %v110 = vadd.s32 %v92, %v108
    %s111 = sld [smem:[#allocation4 + $0x2]]
    %s112 = sld [smem:[#allocation5 + $0x2]]
    %v113 = vstv %s111
    %v114 = vstv %s112
    %v115 = vsel %vm75, %v113, %v114
    %v116 = vsel %vm76, %v113, %v114
    %117 = vset.pattern.permute.xlu0 0
    %118 = vperm.xlu0 %117, %v115
    %v119 = vpop.permute.xlu0 %118
    %120 = vset.pattern.permute.xlu0 0
    %121 = vperm.xlu0 %120, %v116
    %v122 = vpop.permute.xlu0 %121
    %vm123 = vcmp.ge.s32.totalorder %v73, %v119
    %vm124 = vcmp.ge.s32.totalorder %v74, %v122
    %v125 = vsel %vm123, 1, 0
    %v126 = vsel %vm124, 1, 0
    %v127 = vadd.s32 %v109, %v125
    %v128 = vadd.s32 %v110, %v126
    %s129 = sld [smem:[#allocation4 + $0x3]]
    %s130 = sld [smem:[#allocation5 + $0x3]]
    %v131 = vstv %s129
    %v132 = vstv %s130
    %v133 = vsel %vm75, %v131, %v132
    %v134 = vsel %vm76, %v131, %v132
    %135 = vset.pattern.permute.xlu0 0
    %136 = vperm.xlu0 %135, %v133
    %v137 = vpop.permute.xlu0 %136
    %138 = vset.pattern.permute.xlu0 0
    %139 = vperm.xlu0 %138, %v134
    %v140 = vpop.permute.xlu0 %139
    %vm141 = vcmp.ge.s32.totalorder %v73, %v137
    %vm142 = vcmp.ge.s32.totalorder %v74, %v140
    %v143 = vsel %vm141, 1, 0
    %v144 = vsel %vm142, 1, 0
    %v145 = vadd.s32 %v127, %v143
    %v146 = vadd.s32 %v128, %v144
    %s147 = sld [smem:[#allocation4 + $0x4]]
    %s148 = sld [smem:[#allocation5 + $0x4]]
    %v149 = vstv %s147
    %v150 = vstv %s148
    %v151 = vsel %vm75, %v149, %v150
    %v152 = vsel %vm76, %v149, %v150
    %153 = vset.pattern.permute.xlu0 0
    %154 = vperm.xlu0 %153, %v151
    %v155 = vpop.permute.xlu0 %154
    %156 = vset.pattern.permute.xlu0 0
    %157 = vperm.xlu0 %156, %v152
    %v158 = vpop.permute.xlu0 %157
    %vm159 = vcmp.ge.s32.totalorder %v73, %v155
    %vm160 = vcmp.ge.s32.totalorder %v74, %v158
    %v161 = vsel %vm159, 1, 0
    %v162 = vsel %vm160, 1, 0
    %v163 = vadd.s32 %v145, %v161
    %v164 = vadd.s32 %v146, %v162
    %s165 = sld [smem:[#allocation4 + $0x5]]
    %s166 = sld [smem:[#allocation5 + $0x5]]
    %v167 = vstv %s165
    %v168 = vstv %s166
    %v169 = vsel %vm75, %v167, %v168
    %v170 = vsel %vm76, %v167, %v168
    %171 = vset.pattern.permute.xlu0 0
    %172 = vperm.xlu0 %171, %v169
    %v173 = vpop.permute.xlu0 %172
    %174 = vset.pattern.permute.xlu0 0
    %175 = vperm.xlu0 %174, %v170
    %v176 = vpop.permute.xlu0 %175
    %vm177 = vcmp.ge.s32.totalorder %v73, %v173
    %vm178 = vcmp.ge.s32.totalorder %v74, %v176
    %v179 = vsel %vm177, 1, 0
    %v180 = vsel %vm178, 1, 0
    %v181 = vadd.s32 %v163, %v179
    %v182 = vadd.s32 %v164, %v180
    %s183 = sld [smem:[#allocation4 + $0x6]]
    %s184 = sld [smem:[#allocation5 + $0x6]]
    %v185 = vstv %s183
    %v186 = vstv %s184
    %v187 = vsel %vm75, %v185, %v186
    %v188 = vsel %vm76, %v185, %v186
    %189 = vset.pattern.permute.xlu0 0
    %190 = vperm.xlu0 %189, %v187
    %v191 = vpop.permute.xlu0 %190
    %192 = vset.pattern.permute.xlu0 0
    %193 = vperm.xlu0 %192, %v188
    %v194 = vpop.permute.xlu0 %193
    %vm195 = vcmp.ge.s32.totalorder %v73, %v191
    %vm196 = vcmp.ge.s32.totalorder %v74, %v194
    %v197 = vsel %vm195, 1, 0
    %v198 = vsel %vm196, 1, 0
    %v199 = vadd.s32 %v181, %v197
    %v200 = vadd.s32 %v182, %v198
    %s201 = sld [smem:[#allocation4 + $0x7]]
    %s202 = sld [smem:[#allocation5 + $0x7]]
    %v203 = vstv %s201
    %v204 = vstv %s202
    %v205 = vsel %vm75, %v203, %v204
    %v206 = vsel %vm76, %v203, %v204
    %207 = vset.pattern.permute.xlu0 0
    %208 = vperm.xlu0 %207, %v205
    %v209 = vpop.permute.xlu0 %208
    %210 = vset.pattern.permute.xlu0 0
    %211 = vperm.xlu0 %210, %v206
    %v212 = vpop.permute.xlu0 %211
    %vm213 = vcmp.ge.s32.totalorder %v73, %v209
    %vm214 = vcmp.ge.s32.totalorder %v74, %v212
    %v215 = vsel %vm213, 1, 0
    %v216 = vsel %vm214, 1, 0
    %v217 = vadd.s32 %v199, %v215
    %v218 = vadd.s32 %v200, %v216
    %s219 = sld [smem:[#allocation4 + $0x8]]
    %s220 = sld [smem:[#allocation5 + $0x8]]
    %v221 = vstv %s219
    %v222 = vstv %s220
    %v223 = vsel %vm75, %v221, %v222
    %v224 = vsel %vm76, %v221, %v222
    %225 = vset.pattern.permute.xlu0 0
    %226 = vperm.xlu0 %225, %v223
    %v227 = vpop.permute.xlu0 %226
    %228 = vset.pattern.permute.xlu0 0
    %229 = vperm.xlu0 %228, %v224
    %v230 = vpop.permute.xlu0 %229
    %vm231 = vcmp.ge.s32.totalorder %v73, %v227
    %vm232 = vcmp.ge.s32.totalorder %v74, %v230
    %v233 = vsel %vm231, 1, 0
    %v234 = vsel %vm232, 1, 0
    %v235 = vadd.s32 %v217, %v233
    %v236 = vadd.s32 %v218, %v234
    %s237 = sld [smem:[#allocation4 + $0x9]]
    %s238 = sld [smem:[#allocation5 + $0x9]]
    %v239 = vstv %s237
    %v240 = vstv %s238
    %v241 = vsel %vm75, %v239, %v240
    %v242 = vsel %vm76, %v239, %v240
    %243 = vset.pattern.permute.xlu0 0
    %244 = vperm.xlu0 %243, %v241
    %v245 = vpop.permute.xlu0 %244
    %246 = vset.pattern.permute.xlu0 0
    %247 = vperm.xlu0 %246, %v242
    %v248 = vpop.permute.xlu0 %247
    %vm249 = vcmp.ge.s32.totalorder %v73, %v245
    %vm250 = vcmp.ge.s32.totalorder %v74, %v248
    %v251 = vsel %vm249, 1, 0
    %v252 = vsel %vm250, 1, 0
    %v253 = vadd.s32 %v235, %v251
    %v254 = vadd.s32 %v236, %v252
    %s255 = sld [smem:[#allocation4 + $0xa]]
    %s256 = sld [smem:[#allocation5 + $0xa]]
    %v257 = vstv %s255
    %v258 = vstv %s256
    %v259 = vsel %vm75, %v257, %v258
    %v260 = vsel %vm76, %v257, %v258
    %261 = vset.pattern.permute.xlu0 0
    %262 = vperm.xlu0 %261, %v259
    %v263 = vpop.permute.xlu0 %262
    %264 = vset.pattern.permute.xlu0 0
    %265 = vperm.xlu0 %264, %v260
    %v266 = vpop.permute.xlu0 %265
    %vm267 = vcmp.ge.s32.totalorder %v73, %v263
    %vm268 = vcmp.ge.s32.totalorder %v74, %v266
    %v269 = vsel %vm267, 1, 0
    %v270 = vsel %vm268, 1, 0
    %v271 = vadd.s32 %v253, %v269
    %v272 = vadd.s32 %v254, %v270
    %s273 = sld [smem:[#allocation4 + $0xb]]
    %s274 = sld [smem:[#allocation5 + $0xb]]
    %v275 = vstv %s273
    %v276 = vstv %s274
    %v277 = vsel %vm75, %v275, %v276
    %v278 = vsel %vm76, %v275, %v276
    %279 = vset.pattern.permute.xlu0 0
    %280 = vperm.xlu0 %279, %v277
    %v281 = vpop.permute.xlu0 %280
    %282 = vset.pattern.permute.xlu0 0
    %283 = vperm.xlu0 %282, %v278
    %v284 = vpop.permute.xlu0 %283
    %vm285 = vcmp.ge.s32.totalorder %v73, %v281
    %vm286 = vcmp.ge.s32.totalorder %v74, %v284
    %v287 = vsel %vm285, 1, 0
    %v288 = vsel %vm286, 1, 0
    %v289 = vadd.s32 %v271, %v287
    %v290 = vadd.s32 %v272, %v288
    %s291 = sld [smem:[#allocation4 + $0xc]]
    %s292 = sld [smem:[#allocation5 + $0xc]]
    %v293 = vstv %s291
    %v294 = vstv %s292
    %v295 = vsel %vm75, %v293, %v294
    %v296 = vsel %vm76, %v293, %v294
    %297 = vset.pattern.permute.xlu0 0
    %298 = vperm.xlu0 %297, %v295
    %v299 = vpop.permute.xlu0 %298
    %300 = vset.pattern.permute.xlu0 0
    %301 = vperm.xlu0 %300, %v296
    %v302 = vpop.permute.xlu0 %301
    %vm303 = vcmp.ge.s32.totalorder %v73, %v299
    %vm304 = vcmp.ge.s32.totalorder %v74, %v302
    %v305 = vsel %vm303, 1, 0
    %v306 = vsel %vm304, 1, 0
    %v307 = vadd.s32 %v289, %v305
    %v308 = vadd.s32 %v290, %v306
    %s309 = sld [smem:[#allocation4 + $0xd]]
    %s310 = sld [smem:[#allocation5 + $0xd]]
    %v311 = vstv %s309
    %v312 = vstv %s310
    %v313 = vsel %vm75, %v311, %v312
    %v314 = vsel %vm76, %v311, %v312
    %315 = vset.pattern.permute.xlu0 0
    %316 = vperm.xlu0 %315, %v313
    %v317 = vpop.permute.xlu0 %316
    %318 = vset.pattern.permute.xlu0 0
    %319 = vperm.xlu0 %318, %v314
    %v320 = vpop.permute.xlu0 %319
    %vm321 = vcmp.ge.s32.totalorder %v73, %v317
    %vm322 = vcmp.ge.s32.totalorder %v74, %v320
    %v323 = vsel %vm321, 1, 0
    %v324 = vsel %vm322, 1, 0
    %v325 = vadd.s32 %v307, %v323
    %v326 = vadd.s32 %v308, %v324
    %s327 = sld [smem:[#allocation4 + $0xe]]
    %s328 = sld [smem:[#allocation5 + $0xe]]
    %v329 = vstv %s327
    %v330 = vstv %s328
    %v331 = vsel %vm75, %v329, %v330
    %v332 = vsel %vm76, %v329, %v330
    %333 = vset.pattern.permute.xlu0 0
    %334 = vperm.xlu0 %333, %v331
    %v335 = vpop.permute.xlu0 %334
    %336 = vset.pattern.permute.xlu0 0
    %337 = vperm.xlu0 %336, %v332
    %v338 = vpop.permute.xlu0 %337
    %vm339 = vcmp.ge.s32.totalorder %v73, %v335
    %vm340 = vcmp.ge.s32.totalorder %v74, %v338
    %v341 = vsel %vm339, 1, 0
    %v342 = vsel %vm340, 1, 0
    %v343 = vadd.s32 %v325, %v341
    %v344 = vadd.s32 %v326, %v342
    %s345 = sld [smem:[#allocation4 + $0xf]]
    %s346 = sld [smem:[#allocation5 + $0xf]]
    %v347 = vstv %s345
    %v348 = vstv %s346
    %v349 = vsel %vm75, %v347, %v348
    %v350 = vsel %vm76, %v347, %v348
    %351 = vset.pattern.permute.xlu0 0
    %352 = vperm.xlu0 %351, %v349
    %v353 = vpop.permute.xlu0 %352
    %354 = vset.pattern.permute.xlu0 0
    %355 = vperm.xlu0 %354, %v350
    %v356 = vpop.permute.xlu0 %355
    %vm357 = vcmp.ge.s32.totalorder %v73, %v353
    %vm358 = vcmp.ge.s32.totalorder %v74, %v356
    %v359 = vsel %vm357, 1, 0
    %v360 = vsel %vm358, 1, 0
    %v361 = vadd.s32 %v343, %v359
    %v362 = vadd.s32 %v344, %v360
    %s363 = sld [smem:[#allocation4 + $0x10]]
    %s364 = sld [smem:[#allocation5 + $0x10]]
    %v365 = vstv %s363
    %v366 = vstv %s364
    %v367 = vsel %vm75, %v365, %v366
    %v368 = vsel %vm76, %v365, %v366
    %369 = vset.pattern.permute.xlu0 0
    %370 = vperm.xlu0 %369, %v367
    %v371 = vpop.permute.xlu0 %370
    %372 = vset.pattern.permute.xlu0 0
    %373 = vperm.xlu0 %372, %v368
    %v374 = vpop.permute.xlu0 %373
    %vm375 = vcmp.ge.s32.totalorder %v73, %v371
    %vm376 = vcmp.ge.s32.totalorder %v74, %v374
    %v377 = vsel %vm375, 1, 0
    %v378 = vsel %vm376, 1, 0
    %v379 = vadd.s32 %v361, %v377
    %v380 = vadd.s32 %v362, %v378
    %s381 = sld [smem:[#allocation4 + $0x11]]
    %s382 = sld [smem:[#allocation5 + $0x11]]
    %v383 = vstv %s381
    %v384 = vstv %s382
    %v385 = vsel %vm75, %v383, %v384
    %v386 = vsel %vm76, %v383, %v384
    %387 = vset.pattern.permute.xlu0 0
    %388 = vperm.xlu0 %387, %v385
    %v389 = vpop.permute.xlu0 %388
    %390 = vset.pattern.permute.xlu0 0
    %391 = vperm.xlu0 %390, %v386
    %v392 = vpop.permute.xlu0 %391
    %vm393 = vcmp.ge.s32.totalorder %v73, %v389
    %vm394 = vcmp.ge.s32.totalorder %v74, %v392
    %v395 = vsel %vm393, 1, 0
    %v396 = vsel %vm394, 1, 0
    %v397 = vadd.s32 %v379, %v395
    %v398 = vadd.s32 %v380, %v396
    %s399 = sld [smem:[#allocation4 + $0x12]]
    %s400 = sld [smem:[#allocation5 + $0x12]]
    %v401 = vstv %s399
    %v402 = vstv %s400
    %v403 = vsel %vm75, %v401, %v402
    %v404 = vsel %vm76, %v401, %v402
    %405 = vset.pattern.permute.xlu0 0
    %406 = vperm.xlu0 %405, %v403
    %v407 = vpop.permute.xlu0 %406
    %408 = vset.pattern.permute.xlu0 0
    %409 = vperm.xlu0 %408, %v404
    %v410 = vpop.permute.xlu0 %409
    %vm411 = vcmp.ge.s32.totalorder %v73, %v407
    %vm412 = vcmp.ge.s32.totalorder %v74, %v410
    %v413 = vsel %vm411, 1, 0
    %v414 = vsel %vm412, 1, 0
    %v415 = vadd.s32 %v397, %v413
    %v416 = vadd.s32 %v398, %v414
    %s417 = sld [smem:[#allocation4 + $0x13]]
    %s418 = sld [smem:[#allocation5 + $0x13]]
    %v419 = vstv %s417
    %v420 = vstv %s418
    %v421 = vsel %vm75, %v419, %v420
    %v422 = vsel %vm76, %v419, %v420
    %423 = vset.pattern.permute.xlu0 0
    %424 = vperm.xlu0 %423, %v421
    %v425 = vpop.permute.xlu0 %424
    %426 = vset.pattern.permute.xlu0 0
    %427 = vperm.xlu0 %426, %v422
    %v428 = vpop.permute.xlu0 %427
    %vm429 = vcmp.ge.s32.totalorder %v73, %v425
    %vm430 = vcmp.ge.s32.totalorder %v74, %v428
    %v431 = vsel %vm429, 1, 0
    %v432 = vsel %vm430, 1, 0
    %v433 = vadd.s32 %v415, %v431
    %v434 = vadd.s32 %v416, %v432
    %s435 = sld [smem:[#allocation4 + $0x14]]
    %s436 = sld [smem:[#allocation5 + $0x14]]
    %v437 = vstv %s435
    %v438 = vstv %s436
    %v439 = vsel %vm75, %v437, %v438
    %v440 = vsel %vm76, %v437, %v438
    %441 = vset.pattern.permute.xlu0 0
    %442 = vperm.xlu0 %441, %v439
    %v443 = vpop.permute.xlu0 %442
    %444 = vset.pattern.permute.xlu0 0
    %445 = vperm.xlu0 %444, %v440
    %v446 = vpop.permute.xlu0 %445
    %vm447 = vcmp.ge.s32.totalorder %v73, %v443
    %vm448 = vcmp.ge.s32.totalorder %v74, %v446
    %v449 = vsel %vm447, 1, 0
    %v450 = vsel %vm448, 1, 0
    %v451 = vadd.s32 %v433, %v449
    %v452 = vadd.s32 %v434, %v450
    %s453 = sld [smem:[#allocation4 + $0x15]]
    %s454 = sld [smem:[#allocation5 + $0x15]]
    %v455 = vstv %s453
    %v456 = vstv %s454
    %v457 = vsel %vm75, %v455, %v456
    %v458 = vsel %vm76, %v455, %v456
    %459 = vset.pattern.permute.xlu0 0
    %460 = vperm.xlu0 %459, %v457
    %v461 = vpop.permute.xlu0 %460
    %462 = vset.pattern.permute.xlu0 0
    %463 = vperm.xlu0 %462, %v458
    %v464 = vpop.permute.xlu0 %463
    %vm465 = vcmp.ge.s32.totalorder %v73, %v461
    %vm466 = vcmp.ge.s32.totalorder %v74, %v464
    %v467 = vsel %vm465, 1, 0
    %v468 = vsel %vm466, 1, 0
    %v469 = vadd.s32 %v451, %v467
    %v470 = vadd.s32 %v452, %v468
    %s471 = sld [smem:[#allocation4 + $0x16]]
    %s472 = sld [smem:[#allocation5 + $0x16]]
    %v473 = vstv %s471
    %v474 = vstv %s472
    %v475 = vsel %vm75, %v473, %v474
    %v476 = vsel %vm76, %v473, %v474
    %477 = vset.pattern.permute.xlu0 0
    %478 = vperm.xlu0 %477, %v475
    %v479 = vpop.permute.xlu0 %478
    %480 = vset.pattern.permute.xlu0 0
    %481 = vperm.xlu0 %480, %v476
    %v482 = vpop.permute.xlu0 %481
    %vm483 = vcmp.ge.s32.totalorder %v73, %v479
    %vm484 = vcmp.ge.s32.totalorder %v74, %v482
    %v485 = vsel %vm483, 1, 0
    %v486 = vsel %vm484, 1, 0
    %v487 = vadd.s32 %v469, %v485
    %v488 = vadd.s32 %v470, %v486
    %s489 = sld [smem:[#allocation4 + $0x17]]
    %s490 = sld [smem:[#allocation5 + $0x17]]
    %v491 = vstv %s489
    %v492 = vstv %s490
    %v493 = vsel %vm75, %v491, %v492
    %v494 = vsel %vm76, %v491, %v492
    %495 = vset.pattern.permute.xlu0 0
    %496 = vperm.xlu0 %495, %v493
    %v497 = vpop.permute.xlu0 %496
    %498 = vset.pattern.permute.xlu0 0
    %499 = vperm.xlu0 %498, %v494
    %v500 = vpop.permute.xlu0 %499
    %vm501 = vcmp.ge.s32.totalorder %v73, %v497
    %vm502 = vcmp.ge.s32.totalorder %v74, %v500
    %v503 = vsel %vm501, 1, 0
    %v504 = vsel %vm502, 1, 0
    %v505 = vadd.s32 %v487, %v503
    %v506 = vadd.s32 %v488, %v504
    %s507 = sld [smem:[#allocation4 + $0x18]]
    %s508 = sld [smem:[#allocation5 + $0x18]]
    %v509 = vstv %s507
    %v510 = vstv %s508
    %v511 = vsel %vm75, %v509, %v510
    %v512 = vsel %vm76, %v509, %v510
    %513 = vset.pattern.permute.xlu0 0
    %514 = vperm.xlu0 %513, %v511
    %v515 = vpop.permute.xlu0 %514
    %516 = vset.pattern.permute.xlu0 0
    %517 = vperm.xlu0 %516, %v512
    %v518 = vpop.permute.xlu0 %517
    %vm519 = vcmp.ge.s32.totalorder %v73, %v515
    %vm520 = vcmp.ge.s32.totalorder %v74, %v518
    %v521 = vsel %vm519, 1, 0
    %v522 = vsel %vm520, 1, 0
    %v523 = vadd.s32 %v505, %v521
    %v524 = vadd.s32 %v506, %v522
    %s525 = sld [smem:[#allocation4 + $0x19]]
    %s526 = sld [smem:[#allocation5 + $0x19]]
    %v527 = vstv %s525
    %v528 = vstv %s526
    %v529 = vsel %vm75, %v527, %v528
    %v530 = vsel %vm76, %v527, %v528
    %531 = vset.pattern.permute.xlu0 0
    %532 = vperm.xlu0 %531, %v529
    %v533 = vpop.permute.xlu0 %532
    %534 = vset.pattern.permute.xlu0 0
    %535 = vperm.xlu0 %534, %v530
    %v536 = vpop.permute.xlu0 %535
    %vm537 = vcmp.ge.s32.totalorder %v73, %v533
    %vm538 = vcmp.ge.s32.totalorder %v74, %v536
    %v539 = vsel %vm537, 1, 0
    %v540 = vsel %vm538, 1, 0
    %v541 = vadd.s32 %v523, %v539
    %v542 = vadd.s32 %v524, %v540
    %s543 = sld [smem:[#allocation4 + $0x1a]]
    %s544 = sld [smem:[#allocation5 + $0x1a]]
    %v545 = vstv %s543
    %v546 = vstv %s544
    %v547 = vsel %vm75, %v545, %v546
    %v548 = vsel %vm76, %v545, %v546
    %549 = vset.pattern.permute.xlu0 0
    %550 = vperm.xlu0 %549, %v547
    %v551 = vpop.permute.xlu0 %550
    %552 = vset.pattern.permute.xlu0 0
    %553 = vperm.xlu0 %552, %v548
    %v554 = vpop.permute.xlu0 %553
    %vm555 = vcmp.ge.s32.totalorder %v73, %v551
    %vm556 = vcmp.ge.s32.totalorder %v74, %v554
    %v557 = vsel %vm555, 1, 0
    %v558 = vsel %vm556, 1, 0
    %v559 = vadd.s32 %v541, %v557
    %v560 = vadd.s32 %v542, %v558
    %s561 = sld [smem:[#allocation4 + $0x1b]]
    %s562 = sld [smem:[#allocation5 + $0x1b]]
    %v563 = vstv %s561
    %v564 = vstv %s562
    %v565 = vsel %vm75, %v563, %v564
    %v566 = vsel %vm76, %v563, %v564
    %567 = vset.pattern.permute.xlu0 0
    %568 = vperm.xlu0 %567, %v565
    %v569 = vpop.permute.xlu0 %568
    %570 = vset.pattern.permute.xlu0 0
    %571 = vperm.xlu0 %570, %v566
    %v572 = vpop.permute.xlu0 %571
    %vm573 = vcmp.ge.s32.totalorder %v73, %v569
    %vm574 = vcmp.ge.s32.totalorder %v74, %v572
    %v575 = vsel %vm573, 1, 0
    %v576 = vsel %vm574, 1, 0
    %v577 = vadd.s32 %v559, %v575
    %v578 = vadd.s32 %v560, %v576
    %s579 = sld [smem:[#allocation4 + $0x1c]]
    %s580 = sld [smem:[#allocation5 + $0x1c]]
    %v581 = vstv %s579
    %v582 = vstv %s580
    %v583 = vsel %vm75, %v581, %v582
    %v584 = vsel %vm76, %v581, %v582
    %585 = vset.pattern.permute.xlu0 0
    %586 = vperm.xlu0 %585, %v583
    %v587 = vpop.permute.xlu0 %586
    %588 = vset.pattern.permute.xlu0 0
    %589 = vperm.xlu0 %588, %v584
    %v590 = vpop.permute.xlu0 %589
    %vm591 = vcmp.ge.s32.totalorder %v73, %v587
    %vm592 = vcmp.ge.s32.totalorder %v74, %v590
    %v593 = vsel %vm591, 1, 0
    %v594 = vsel %vm592, 1, 0
    %v595 = vadd.s32 %v577, %v593
    %v596 = vadd.s32 %v578, %v594
    %s597 = sld [smem:[#allocation4 + $0x1d]]
    %s598 = sld [smem:[#allocation5 + $0x1d]]
    %v599 = vstv %s597
    %v600 = vstv %s598
    %v601 = vsel %vm75, %v599, %v600
    %v602 = vsel %vm76, %v599, %v600
    %603 = vset.pattern.permute.xlu0 0
    %604 = vperm.xlu0 %603, %v601
    %v605 = vpop.permute.xlu0 %604
    %606 = vset.pattern.permute.xlu0 0
    %607 = vperm.xlu0 %606, %v602
    %v608 = vpop.permute.xlu0 %607
    %vm609 = vcmp.ge.s32.totalorder %v73, %v605
    %vm610 = vcmp.ge.s32.totalorder %v74, %v608
    %v611 = vsel %vm609, 1, 0
    %v612 = vsel %vm610, 1, 0
    %v613 = vadd.s32 %v595, %v611
    %v614 = vadd.s32 %v596, %v612
    %s615 = sld [smem:[#allocation4 + $0x1e]]
    %s616 = sld [smem:[#allocation5 + $0x1e]]
    %v617 = vstv %s615
    %v618 = vstv %s616
    %v619 = vsel %vm75, %v617, %v618
    %v620 = vsel %vm76, %v617, %v618
    %621 = vset.pattern.permute.xlu0 0
    %622 = vperm.xlu0 %621, %v619
    %v623 = vpop.permute.xlu0 %622
    %624 = vset.pattern.permute.xlu0 0
    %625 = vperm.xlu0 %624, %v620
    %v626 = vpop.permute.xlu0 %625
    %vm627 = vcmp.ge.s32.totalorder %v73, %v623
    %vm628 = vcmp.ge.s32.totalorder %v74, %v626
    %v629 = vsel %vm627, 1, 0
    %v630 = vsel %vm628, 1, 0
    %v631 = vadd.s32 %v613, %v629
    %v632 = vadd.s32 %v614, %v630
    %s633 = sld [smem:[#allocation4 + $0x1f]]
    %s634 = sld [smem:[#allocation5 + $0x1f]]
    %v635 = vstv %s633
    %v636 = vstv %s634
    %v637 = vsel %vm75, %v635, %v636
    %v638 = vsel %vm76, %v635, %v636
    %639 = vset.pattern.permute.xlu0 0
    %640 = vperm.xlu0 %639, %v637
    %v641 = vpop.permute.xlu0 %640
    %642 = vset.pattern.permute.xlu0 0
    %643 = vperm.xlu0 %642, %v638
    %v644 = vpop.permute.xlu0 %643
    %vm645 = vcmp.ge.s32.totalorder %v73, %v641
    %vm646 = vcmp.ge.s32.totalorder %v74, %v644
    %v647 = vsel %vm645, 1, 0
    %v648 = vsel %vm646, 1, 0
    %v649 = vadd.s32 %v631, %v647
    %v650 = vadd.s32 %v632, %v648
    %s651 = sld [smem:[#allocation4 + $0x20]]
    %s652 = sld [smem:[#allocation5 + $0x20]]
    %v653 = vstv %s651
    %v654 = vstv %s652
    %v655 = vsel %vm75, %v653, %v654
    %v656 = vsel %vm76, %v653, %v654
    %657 = vset.pattern.permute.xlu0 0
    %658 = vperm.xlu0 %657, %v655
    %v659 = vpop.permute.xlu0 %658
    %660 = vset.pattern.permute.xlu0 0
    %661 = vperm.xlu0 %660, %v656
    %v662 = vpop.permute.xlu0 %661
    %vm663 = vcmp.ge.s32.totalorder %v73, %v659
    %vm664 = vcmp.ge.s32.totalorder %v74, %v662
    %v665 = vsel %vm663, 1, 0
    %v666 = vsel %vm664, 1, 0
    %v667 = vadd.s32 %v649, %v665
    %v668 = vadd.s32 %v650, %v666
    %s669 = sld [smem:[#allocation4 + $0x21]]
    %s670 = sld [smem:[#allocation5 + $0x21]]
    %v671 = vstv %s669
    %v672 = vstv %s670
    %v673 = vsel %vm75, %v671, %v672
    %v674 = vsel %vm76, %v671, %v672
    %675 = vset.pattern.permute.xlu0 0
    %676 = vperm.xlu0 %675, %v673
    %v677 = vpop.permute.xlu0 %676
    %678 = vset.pattern.permute.xlu0 0
    %679 = vperm.xlu0 %678, %v674
    %v680 = vpop.permute.xlu0 %679
    %vm681 = vcmp.ge.s32.totalorder %v73, %v677
    %vm682 = vcmp.ge.s32.totalorder %v74, %v680
    %v683 = vsel %vm681, 1, 0
    %v684 = vsel %vm682, 1, 0
    %v685 = vadd.s32 %v667, %v683
    %v686 = vadd.s32 %v668, %v684
    %s687 = sld [smem:[#allocation4 + $0x22]]
    %s688 = sld [smem:[#allocation5 + $0x22]]
    %v689 = vstv %s687
    %v690 = vstv %s688
    %v691 = vsel %vm75, %v689, %v690
    %v692 = vsel %vm76, %v689, %v690
    %693 = vset.pattern.permute.xlu0 0
    %694 = vperm.xlu0 %693, %v691
    %v695 = vpop.permute.xlu0 %694
    %696 = vset.pattern.permute.xlu0 0
    %697 = vperm.xlu0 %696, %v692
    %v698 = vpop.permute.xlu0 %697
    %vm699 = vcmp.ge.s32.totalorder %v73, %v695
    %vm700 = vcmp.ge.s32.totalorder %v74, %v698
    %v701 = vsel %vm699, 1, 0
    %v702 = vsel %vm700, 1, 0
    %v703 = vadd.s32 %v685, %v701
    %v704 = vadd.s32 %v686, %v702
    %s705 = sld [smem:[#allocation4 + $0x23]]
    %s706 = sld [smem:[#allocation5 + $0x23]]
    %v707 = vstv %s705
    %v708 = vstv %s706
    %v709 = vsel %vm75, %v707, %v708
    %v710 = vsel %vm76, %v707, %v708
    %711 = vset.pattern.permute.xlu0 0
    %712 = vperm.xlu0 %711, %v709
    %v713 = vpop.permute.xlu0 %712
    %714 = vset.pattern.permute.xlu0 0
    %715 = vperm.xlu0 %714, %v710
    %v716 = vpop.permute.xlu0 %715
    %vm717 = vcmp.ge.s32.totalorder %v73, %v713
    %vm718 = vcmp.ge.s32.totalorder %v74, %v716
    %v719 = vsel %vm717, 1, 0
    %v720 = vsel %vm718, 1, 0
    %v721 = vadd.s32 %v703, %v719
    %v722 = vadd.s32 %v704, %v720
    %s723 = sld [smem:[#allocation4 + $0x24]]
    %s724 = sld [smem:[#allocation5 + $0x24]]
    %v725 = vstv %s723
    %v726 = vstv %s724
    %v727 = vsel %vm75, %v725, %v726
    %v728 = vsel %vm76, %v725, %v726
    %729 = vset.pattern.permute.xlu0 0
    %730 = vperm.xlu0 %729, %v727
    %v731 = vpop.permute.xlu0 %730
    %732 = vset.pattern.permute.xlu0 0
    %733 = vperm.xlu0 %732, %v728
    %v734 = vpop.permute.xlu0 %733
    %vm735 = vcmp.ge.s32.totalorder %v73, %v731
    %vm736 = vcmp.ge.s32.totalorder %v74, %v734
    %v737 = vsel %vm735, 1, 0
    %v738 = vsel %vm736, 1, 0
    %v739 = vadd.s32 %v721, %v737
    %v740 = vadd.s32 %v722, %v738
    %s741 = sld [smem:[#allocation4 + $0x25]]
    %s742 = sld [smem:[#allocation5 + $0x25]]
    %v743 = vstv %s741
    %v744 = vstv %s742
    %v745 = vsel %vm75, %v743, %v744
    %v746 = vsel %vm76, %v743, %v744
    %747 = vset.pattern.permute.xlu0 0
    %748 = vperm.xlu0 %747, %v745
    %v749 = vpop.permute.xlu0 %748
    %750 = vset.pattern.permute.xlu0 0
    %751 = vperm.xlu0 %750, %v746
    %v752 = vpop.permute.xlu0 %751
    %vm753 = vcmp.ge.s32.totalorder %v73, %v749
    %vm754 = vcmp.ge.s32.totalorder %v74, %v752
    %v755 = vsel %vm753, 1, 0
    %v756 = vsel %vm754, 1, 0
    %v757 = vadd.s32 %v739, %v755
    %v758 = vadd.s32 %v740, %v756
    %s759 = sld [smem:[#allocation4 + $0x26]]
    %s760 = sld [smem:[#allocation5 + $0x26]]
    %v761 = vstv %s759
    %v762 = vstv %s760
    %v763 = vsel %vm75, %v761, %v762
    %v764 = vsel %vm76, %v761, %v762
    %765 = vset.pattern.permute.xlu0 0
    %766 = vperm.xlu0 %765, %v763
    %v767 = vpop.permute.xlu0 %766
    %768 = vset.pattern.permute.xlu0 0
    %769 = vperm.xlu0 %768, %v764
    %v770 = vpop.permute.xlu0 %769
    %vm771 = vcmp.ge.s32.totalorder %v73, %v767
    %vm772 = vcmp.ge.s32.totalorder %v74, %v770
    %v773 = vsel %vm771, 1, 0
    %v774 = vsel %vm772, 1, 0
    %v775 = vadd.s32 %v757, %v773
    %v776 = vadd.s32 %v758, %v774
    %s777 = sld [smem:[#allocation4 + $0x27]]
    %s778 = sld [smem:[#allocation5 + $0x27]]
    %v779 = vstv %s777
    %v780 = vstv %s778
    %v781 = vsel %vm75, %v779, %v780
    %v782 = vsel %vm76, %v779, %v780
    %783 = vset.pattern.permute.xlu0 0
    %784 = vperm.xlu0 %783, %v781
    %v785 = vpop.permute.xlu0 %784
    %786 = vset.pattern.permute.xlu0 0
    %787 = vperm.xlu0 %786, %v782
    %v788 = vpop.permute.xlu0 %787
    %vm789 = vcmp.ge.s32.totalorder %v73, %v785
    %vm790 = vcmp.ge.s32.totalorder %v74, %v788
    %v791 = vsel %vm789, 1, 0
    %v792 = vsel %vm790, 1, 0
    %v793 = vadd.s32 %v775, %v791
    %v794 = vadd.s32 %v776, %v792
    %s795 = sld [smem:[#allocation4 + $0x28]]
    %s796 = sld [smem:[#allocation5 + $0x28]]
    %v797 = vstv %s795
    %v798 = vstv %s796
    %v799 = vsel %vm75, %v797, %v798
    %v800 = vsel %vm76, %v797, %v798
    %801 = vset.pattern.permute.xlu0 0
    %802 = vperm.xlu0 %801, %v799
    %v803 = vpop.permute.xlu0 %802
    %804 = vset.pattern.permute.xlu0 0
    %805 = vperm.xlu0 %804, %v800
    %v806 = vpop.permute.xlu0 %805
    %vm807 = vcmp.ge.s32.totalorder %v73, %v803
    %vm808 = vcmp.ge.s32.totalorder %v74, %v806
    %v809 = vsel %vm807, 1, 0
    %v810 = vsel %vm808, 1, 0
    %v811 = vadd.s32 %v793, %v809
    %v812 = vadd.s32 %v794, %v810
    %s813 = sld [smem:[#allocation4 + $0x29]]
    %s814 = sld [smem:[#allocation5 + $0x29]]
    %v815 = vstv %s813
    %v816 = vstv %s814
    %v817 = vsel %vm75, %v815, %v816
    %v818 = vsel %vm76, %v815, %v816
    %819 = vset.pattern.permute.xlu0 0
    %820 = vperm.xlu0 %819, %v817
    %v821 = vpop.permute.xlu0 %820
    %822 = vset.pattern.permute.xlu0 0
    %823 = vperm.xlu0 %822, %v818
    %v824 = vpop.permute.xlu0 %823
    %vm825 = vcmp.ge.s32.totalorder %v73, %v821
    %vm826 = vcmp.ge.s32.totalorder %v74, %v824
    %v827 = vsel %vm825, 1, 0
    %v828 = vsel %vm826, 1, 0
    %v829 = vadd.s32 %v811, %v827
    %v830 = vadd.s32 %v812, %v828
    %s831 = sld [smem:[#allocation4 + $0x2a]]
    %s832 = sld [smem:[#allocation5 + $0x2a]]
    %v833 = vstv %s831
    %v834 = vstv %s832
    %v835 = vsel %vm75, %v833, %v834
    %v836 = vsel %vm76, %v833, %v834
    %837 = vset.pattern.permute.xlu0 0
    %838 = vperm.xlu0 %837, %v835
    %v839 = vpop.permute.xlu0 %838
    %840 = vset.pattern.permute.xlu0 0
    %841 = vperm.xlu0 %840, %v836
    %v842 = vpop.permute.xlu0 %841
    %vm843 = vcmp.ge.s32.totalorder %v73, %v839
    %vm844 = vcmp.ge.s32.totalorder %v74, %v842
    %v845 = vsel %vm843, 1, 0
    %v846 = vsel %vm844, 1, 0
    %v847 = vadd.s32 %v829, %v845
    %v848 = vadd.s32 %v830, %v846
    %s849 = sld [smem:[#allocation4 + $0x2b]]
    %s850 = sld [smem:[#allocation5 + $0x2b]]
    %v851 = vstv %s849
    %v852 = vstv %s850
    %v853 = vsel %vm75, %v851, %v852
    %v854 = vsel %vm76, %v851, %v852
    %855 = vset.pattern.permute.xlu0 0
    %856 = vperm.xlu0 %855, %v853
    %v857 = vpop.permute.xlu0 %856
    %858 = vset.pattern.permute.xlu0 0
    %859 = vperm.xlu0 %858, %v854
    %v860 = vpop.permute.xlu0 %859
    %vm861 = vcmp.ge.s32.totalorder %v73, %v857
    %vm862 = vcmp.ge.s32.totalorder %v74, %v860
    %v863 = vsel %vm861, 1, 0
    %v864 = vsel %vm862, 1, 0
    %v865 = vadd.s32 %v847, %v863
    %v866 = vadd.s32 %v848, %v864
    %s867 = sld [smem:[#allocation4 + $0x2c]]
    %s868 = sld [smem:[#allocation5 + $0x2c]]
    %v869 = vstv %s867
    %v870 = vstv %s868
    %v871 = vsel %vm75, %v869, %v870
    %v872 = vsel %vm76, %v869, %v870
    %873 = vset.pattern.permute.xlu0 0
    %874 = vperm.xlu0 %873, %v871
    %v875 = vpop.permute.xlu0 %874
    %876 = vset.pattern.permute.xlu0 0
    %877 = vperm.xlu0 %876, %v872
    %v878 = vpop.permute.xlu0 %877
    %vm879 = vcmp.ge.s32.totalorder %v73, %v875
    %vm880 = vcmp.ge.s32.totalorder %v74, %v878
    %v881 = vsel %vm879, 1, 0
    %v882 = vsel %vm880, 1, 0
    %v883 = vadd.s32 %v865, %v881
    %v884 = vadd.s32 %v866, %v882
    %s885 = sld [smem:[#allocation4 + $0x2d]]
    %s886 = sld [smem:[#allocation5 + $0x2d]]
    %v887 = vstv %s885
    %v888 = vstv %s886
    %v889 = vsel %vm75, %v887, %v888
    %v890 = vsel %vm76, %v887, %v888
    %891 = vset.pattern.permute.xlu0 0
    %892 = vperm.xlu0 %891, %v889
    %v893 = vpop.permute.xlu0 %892
    %894 = vset.pattern.permute.xlu0 0
    %895 = vperm.xlu0 %894, %v890
    %v896 = vpop.permute.xlu0 %895
    %vm897 = vcmp.ge.s32.totalorder %v73, %v893
    %vm898 = vcmp.ge.s32.totalorder %v74, %v896
    %v899 = vsel %vm897, 1, 0
    %v900 = vsel %vm898, 1, 0
    %v901 = vadd.s32 %v883, %v899
    %v902 = vadd.s32 %v884, %v900
    %s903 = sld [smem:[#allocation4 + $0x2e]]
    %s904 = sld [smem:[#allocation5 + $0x2e]]
    %v905 = vstv %s903
    %v906 = vstv %s904
    %v907 = vsel %vm75, %v905, %v906
    %v908 = vsel %vm76, %v905, %v906
    %909 = vset.pattern.permute.xlu0 0
    %910 = vperm.xlu0 %909, %v907
    %v911 = vpop.permute.xlu0 %910
    %912 = vset.pattern.permute.xlu0 0
    %913 = vperm.xlu0 %912, %v908
    %v914 = vpop.permute.xlu0 %913
    %vm915 = vcmp.ge.s32.totalorder %v73, %v911
    %vm916 = vcmp.ge.s32.totalorder %v74, %v914
    %v917 = vsel %vm915, 1, 0
    %v918 = vsel %vm916, 1, 0
    %v919 = vadd.s32 %v901, %v917
    %v920 = vadd.s32 %v902, %v918
    %s921 = sld [smem:[#allocation4 + $0x2f]]
    %s922 = sld [smem:[#allocation5 + $0x2f]]
    %v923 = vstv %s921
    %v924 = vstv %s922
    %v925 = vsel %vm75, %v923, %v924
    %v926 = vsel %vm76, %v923, %v924
    %927 = vset.pattern.permute.xlu0 0
    %928 = vperm.xlu0 %927, %v925
    %v929 = vpop.permute.xlu0 %928
    %930 = vset.pattern.permute.xlu0 0
    %931 = vperm.xlu0 %930, %v926
    %v932 = vpop.permute.xlu0 %931
    %vm933 = vcmp.ge.s32.totalorder %v73, %v929
    %vm934 = vcmp.ge.s32.totalorder %v74, %v932
    %v935 = vsel %vm933, 1, 0
    %v936 = vsel %vm934, 1, 0
    %v937 = vadd.s32 %v919, %v935
    %v938 = vadd.s32 %v920, %v936
    %s939 = sld [smem:[#allocation4 + $0x30]]
    %s940 = sld [smem:[#allocation5 + $0x30]]
    %v941 = vstv %s939
    %v942 = vstv %s940
    %v943 = vsel %vm75, %v941, %v942
    %v944 = vsel %vm76, %v941, %v942
    %945 = vset.pattern.permute.xlu0 0
    %946 = vperm.xlu0 %945, %v943
    %v947 = vpop.permute.xlu0 %946
    %948 = vset.pattern.permute.xlu0 0
    %949 = vperm.xlu0 %948, %v944
    %v950 = vpop.permute.xlu0 %949
    %vm951 = vcmp.ge.s32.totalorder %v73, %v947
    %vm952 = vcmp.ge.s32.totalorder %v74, %v950
    %v953 = vsel %vm951, 1, 0
    %v954 = vsel %vm952, 1, 0
    %v955 = vadd.s32 %v937, %v953
    %v956 = vadd.s32 %v938, %v954
    %s957 = sld [smem:[#allocation4 + $0x31]]
    %s958 = sld [smem:[#allocation5 + $0x31]]
    %v959 = vstv %s957
    %v960 = vstv %s958
    %v961 = vsel %vm75, %v959, %v960
    %v962 = vsel %vm76, %v959, %v960
    %963 = vset.pattern.permute.xlu0 0
    %964 = vperm.xlu0 %963, %v961
    %v965 = vpop.permute.xlu0 %964
    %966 = vset.pattern.permute.xlu0 0
    %967 = vperm.xlu0 %966, %v962
    %v968 = vpop.permute.xlu0 %967
    %vm969 = vcmp.ge.s32.totalorder %v73, %v965
    %vm970 = vcmp.ge.s32.totalorder %v74, %v968
    %v971 = vsel %vm969, 1, 0
    %v972 = vsel %vm970, 1, 0
    %v973 = vadd.s32 %v955, %v971
    %v974 = vadd.s32 %v956, %v972
    %s975 = sld [smem:[#allocation4 + $0x32]]
    %s976 = sld [smem:[#allocation5 + $0x32]]
    %v977 = vstv %s975
    %v978 = vstv %s976
    %v979 = vsel %vm75, %v977, %v978
    %v980 = vsel %vm76, %v977, %v978
    %981 = vset.pattern.permute.xlu0 0
    %982 = vperm.xlu0 %981, %v979
    %v983 = vpop.permute.xlu0 %982
    %984 = vset.pattern.permute.xlu0 0
    %985 = vperm.xlu0 %984, %v980
    %v986 = vpop.permute.xlu0 %985
    %vm987 = vcmp.ge.s32.totalorder %v73, %v983
    %vm988 = vcmp.ge.s32.totalorder %v74, %v986
    %v989 = vsel %vm987, 1, 0
    %v990 = vsel %vm988, 1, 0
    %v991 = vadd.s32 %v973, %v989
    %v992 = vadd.s32 %v974, %v990
    %s993 = sld [smem:[#allocation4 + $0x33]]
    %s994 = sld [smem:[#allocation5 + $0x33]]
    %v995 = vstv %s993
    %v996 = vstv %s994
    %v997 = vsel %vm75, %v995, %v996
    %v998 = vsel %vm76, %v995, %v996
    %999 = vset.pattern.permute.xlu0 0
    %1000 = vperm.xlu0 %999, %v997
    %v1001 = vpop.permute.xlu0 %1000
    %1002 = vset.pattern.permute.xlu0 0
    %1003 = vperm.xlu0 %1002, %v998
    %v1004 = vpop.permute.xlu0 %1003
    %vm1005 = vcmp.ge.s32.totalorder %v73, %v1001
    %vm1006 = vcmp.ge.s32.totalorder %v74, %v1004
    %v1007 = vsel %vm1005, 1, 0
    %v1008 = vsel %vm1006, 1, 0
    %v1009 = vadd.s32 %v991, %v1007
    %v1010 = vadd.s32 %v992, %v1008
    %s1011 = sld [smem:[#allocation4 + $0x34]]
    %s1012 = sld [smem:[#allocation5 + $0x34]]
    %v1013 = vstv %s1011
    %v1014 = vstv %s1012
    %v1015 = vsel %vm75, %v1013, %v1014
    %v1016 = vsel %vm76, %v1013, %v1014
    %1017 = vset.pattern.permute.xlu0 0
    %1018 = vperm.xlu0 %1017, %v1015
    %v1019 = vpop.permute.xlu0 %1018
    %1020 = vset.pattern.permute.xlu0 0
    %1021 = vperm.xlu0 %1020, %v1016
    %v1022 = vpop.permute.xlu0 %1021
    %vm1023 = vcmp.ge.s32.totalorder %v73, %v1019
    %vm1024 = vcmp.ge.s32.totalorder %v74, %v1022
    %v1025 = vsel %vm1023, 1, 0
    %v1026 = vsel %vm1024, 1, 0
    %v1027 = vadd.s32 %v1009, %v1025
    %v1028 = vadd.s32 %v1010, %v1026
    %s1029 = sld [smem:[#allocation4 + $0x35]]
    %s1030 = sld [smem:[#allocation5 + $0x35]]
    %v1031 = vstv %s1029
    %v1032 = vstv %s1030
    %v1033 = vsel %vm75, %v1031, %v1032
    %v1034 = vsel %vm76, %v1031, %v1032
    %1035 = vset.pattern.permute.xlu0 0
    %1036 = vperm.xlu0 %1035, %v1033
    %v1037 = vpop.permute.xlu0 %1036
    %1038 = vset.pattern.permute.xlu0 0
    %1039 = vperm.xlu0 %1038, %v1034
    %v1040 = vpop.permute.xlu0 %1039
    %vm1041 = vcmp.ge.s32.totalorder %v73, %v1037
    %vm1042 = vcmp.ge.s32.totalorder %v74, %v1040
    %v1043 = vsel %vm1041, 1, 0
    %v1044 = vsel %vm1042, 1, 0
    %v1045 = vadd.s32 %v1027, %v1043
    %v1046 = vadd.s32 %v1028, %v1044
    %s1047 = sld [smem:[#allocation4 + $0x36]]
    %s1048 = sld [smem:[#allocation5 + $0x36]]
    %v1049 = vstv %s1047
    %v1050 = vstv %s1048
    %v1051 = vsel %vm75, %v1049, %v1050
    %v1052 = vsel %vm76, %v1049, %v1050
    %1053 = vset.pattern.permute.xlu0 0
    %1054 = vperm.xlu0 %1053, %v1051
    %v1055 = vpop.permute.xlu0 %1054
    %1056 = vset.pattern.permute.xlu0 0
    %1057 = vperm.xlu0 %1056, %v1052
    %v1058 = vpop.permute.xlu0 %1057
    %vm1059 = vcmp.ge.s32.totalorder %v73, %v1055
    %vm1060 = vcmp.ge.s32.totalorder %v74, %v1058
    %v1061 = vsel %vm1059, 1, 0
    %v1062 = vsel %vm1060, 1, 0
    %v1063 = vadd.s32 %v1045, %v1061
    %v1064 = vadd.s32 %v1046, %v1062
    %s1065 = sld [smem:[#allocation4 + $0x37]]
    %s1066 = sld [smem:[#allocation5 + $0x37]]
    %v1067 = vstv %s1065
    %v1068 = vstv %s1066
    %v1069 = vsel %vm75, %v1067, %v1068
    %v1070 = vsel %vm76, %v1067, %v1068
    %1071 = vset.pattern.permute.xlu0 0
    %1072 = vperm.xlu0 %1071, %v1069
    %v1073 = vpop.permute.xlu0 %1072
    %1074 = vset.pattern.permute.xlu0 0
    %1075 = vperm.xlu0 %1074, %v1070
    %v1076 = vpop.permute.xlu0 %1075
    %vm1077 = vcmp.ge.s32.totalorder %v73, %v1073
    %vm1078 = vcmp.ge.s32.totalorder %v74, %v1076
    %v1079 = vsel %vm1077, 1, 0
    %v1080 = vsel %vm1078, 1, 0
    %v1081 = vadd.s32 %v1063, %v1079
    %v1082 = vadd.s32 %v1064, %v1080
    %s1083 = sld [smem:[#allocation4 + $0x38]]
    %s1084 = sld [smem:[#allocation5 + $0x38]]
    %v1085 = vstv %s1083
    %v1086 = vstv %s1084
    %v1087 = vsel %vm75, %v1085, %v1086
    %v1088 = vsel %vm76, %v1085, %v1086
    %1089 = vset.pattern.permute.xlu0 0
    %1090 = vperm.xlu0 %1089, %v1087
    %v1091 = vpop.permute.xlu0 %1090
    %1092 = vset.pattern.permute.xlu0 0
    %1093 = vperm.xlu0 %1092, %v1088
    %v1094 = vpop.permute.xlu0 %1093
    %vm1095 = vcmp.ge.s32.totalorder %v73, %v1091
    %vm1096 = vcmp.ge.s32.totalorder %v74, %v1094
    %v1097 = vsel %vm1095, 1, 0
    %v1098 = vsel %vm1096, 1, 0
    %v1099 = vadd.s32 %v1081, %v1097
    %v1100 = vadd.s32 %v1082, %v1098
    %s1101 = sld [smem:[#allocation4 + $0x39]]
    %s1102 = sld [smem:[#allocation5 + $0x39]]
    %v1103 = vstv %s1101
    %v1104 = vstv %s1102
    %v1105 = vsel %vm75, %v1103, %v1104
    %v1106 = vsel %vm76, %v1103, %v1104
    %1107 = vset.pattern.permute.xlu0 0
    %1108 = vperm.xlu0 %1107, %v1105
    %v1109 = vpop.permute.xlu0 %1108
    %1110 = vset.pattern.permute.xlu0 0
    %1111 = vperm.xlu0 %1110, %v1106
    %v1112 = vpop.permute.xlu0 %1111
    %vm1113 = vcmp.ge.s32.totalorder %v73, %v1109
    %vm1114 = vcmp.ge.s32.totalorder %v74, %v1112
    %v1115 = vsel %vm1113, 1, 0
    %v1116 = vsel %vm1114, 1, 0
    %v1117 = vadd.s32 %v1099, %v1115
    %v1118 = vadd.s32 %v1100, %v1116
    %v1119 = vxor.u32 %v55, 2246822507
    %v1120 = vxor.u32 %v56, 2246822507
    %v1121 = vshrl.u32 %v1119, 16
    %v1122 = vshrl.u32 %v1120, 16
    %v1123 = vxor.u32 %v1119, %v1121
    %v1124 = vxor.u32 %v1120, %v1122
    %v1125 = vmul.u32 %v1123, 2146121005
    %v1126 = vmul.u32 %v1124, 2146121005
    %v1127 = vshrl.u32 %v1125, 15
    %v1128 = vshrl.u32 %v1126, 15
    %v1129 = vxor.u32 %v1125, %v1127
    %v1130 = vxor.u32 %v1126, %v1128
    %v1131 = vmul.u32 %v1129, 2221713035
    %v1132 = vmul.u32 %v1130, 2221713035
    %v1133 = vshrl.u32 %v1131, 16
    %v1134 = vshrl.u32 %v1132, 16
    %v1135 = vxor.u32 %v1131, %v1133
    %v1136 = vxor.u32 %v1132, %v1134
    %v1137 = vshrl.u32 %v1135, 8
    %v1138 = vshrl.u32 %v1136, 8
    %vm1139 = vcmp.lt.s32.totalorder %v1137, 5033165
    %vm1140 = vcmp.lt.s32.totalorder %v1138, 5033165
    %vm1141 = vcmp.lt.s32.totalorder %v37, 59
    %vm1142 = vcmp.lt.s32.totalorder %v38, 59
    %vm1143 = vmand %vm1139, %vm1141
    %vm1144 = vmand %vm1140, %vm1142
    %v1145 = vsel %vm1143, %v1117, %v37
    %v1146 = vsel %vm1144, %v1118, %v38
    %1147 = vst [vmem:[#allocation9] sm:$0xff] %v1145
    %1148 = vst [vmem:[#allocation9 + $0x8] sm:$0xff] %v1146
    // Predicated region
    $region10: #{tpu_custom_call.1} parent=1 // pred_check
      _
    $region11: #{tpu_custom_call.1} parent=1 // pred_check_branch
      %1150 = sbr.rel (0) target = $region13
    $region12: #{tpu_custom_call.1} parent=1 // pred_region
      %s1152 = ssub.s32 256, 256
      %1153 = vsyncadd [#allocation8], %s1152
      %s1154 = sshll.u32 [#allocation9], 4
      %s1155 = int_to_ptr.vmem [resolvable:$true] %s1154
      %1160 = dma.vmem_to_hbm [thread:$0]  %s1155, 256, %s4, [#allocation8], 128, 128, 8
    $region13: #{tpu_custom_call.1} parent=1 // pred_fallthru
      _
    // Predicated region
    $region14: #{tpu_custom_call.1} parent=1 // pred_check
      _
    $region15: #{tpu_custom_call.1} parent=1 // pred_check_branch
      %1162 = sbr.rel (0) target = $region17
    $region16: #{tpu_custom_call.1} parent=1 // pred_region
      %1163 = dma.done [#allocation8], 256
    $region17: #{tpu_custom_call.1} parent=1 // pred_fallthru
      _
    %1164 = vsyncpa [#allocation7], 1
    %1165 = vsyncpa [#allocation8], 1

</llo_original>
